<compile_context>
chip_gen: v5e
topology: v5e:2x2
jax: 0.10.0
libtpu: 0.0.40
codegen_flags: <defaults>
</compile_context>

<pallas_src>
import jax
import jax.numpy as jnp
from jax.experimental import pallas as pl
from jax.experimental.pallas import tpu as pltpu

_EPS = 1e-5  # torch.nn.BatchNorm2d default eps

_PARAM_ORDER = (
    "wl1", "bl1", "gl1", "betal1",      # local conv1 (3->64) + BN1
    "wl2", "bl2", "gl2", "betal2",      # local conv2 (64->64) + BN2
    "wg1", "bg1", "gg1", "betag1",      # global conv1 (3->64) + BN1
    "wg2", "bg2", "gg2", "betag2",      # global conv2 (64->64) + BN2
)

# TODO(synk): the reference module declares nn.Conv2d(2, 64) inside global_att,
# but its input `e` has 3 channels, so the PyTorch forward would raise a runtime
# error.  We use in_channels=3 for that conv so the branch is computable.


def _pick_tile(hw):
    """Largest spatial tile (multiple of 128, <= 2048) dividing HW, else full HW."""
    for t in (2048, 1024, 512, 256, 128):
        if hw % t == 0:
            return t
    return hw


# ---------------------------------------------------------------------------
# Pass 1: per-batch channel sums + second moments of e = rgb + thermal
# ---------------------------------------------------------------------------
def _stats_e_kernel(rgb_ref, th_ref, sum_e_ref, sum_ee_ref):
    t = pl.program_id(1)

    @pl.when(t == 0)
    def _():
        sum_e_ref[...] = jnp.zeros_like(sum_e_ref)
        sum_ee_ref[...] = jnp.zeros_like(sum_ee_ref)

    e = rgb_ref[0] + th_ref[0]                                        # (3, T)
    sum_e_ref[...] += jnp.sum(e, axis=-1, keepdims=True)[None]        # (1,3,1)
    sum_ee_ref[...] += jnp.einsum(
        "ct,dt->cd", e, e, preferred_element_type=jnp.float32)[None]  # (1,3,3)


# ---------------------------------------------------------------------------
# Pass 2: per-channel sum / sum-of-squares of h2 = W2 @ relu(A1 @ e + c1)
# ---------------------------------------------------------------------------
def _stats_h_kernel(rgb_ref, th_ref, a1_ref, c1_ref, w2_ref,
                    sum_h_ref, sum_hsq_ref):
    t = pl.program_id(1)

    @pl.when(t == 0)
    def _():
        sum_h_ref[...] = jnp.zeros_like(sum_h_ref)
        sum_hsq_ref[...] = jnp.zeros_like(sum_hsq_ref)

    e = rgb_ref[0] + th_ref[0]                                        # (3, T)
    z = jnp.maximum(
        jnp.dot(a1_ref[...], e, preferred_element_type=jnp.float32) + c1_ref[...],
        0.0)                                                          # (64, T)
    h = jnp.dot(w2_ref[...], z, preferred_element_type=jnp.float32)   # (64, T)
    sum_h_ref[...] += jnp.sum(h, axis=-1, keepdims=True)[None]        # (1,64,1)
    sum_hsq_ref[...] += jnp.sum(h * h, axis=-1, keepdims=True)[None]  # (1,64,1)


# ---------------------------------------------------------------------------
# Pass 3: fused normalize + global-branch add, lane-dense (N, 64, HW) store
# ---------------------------------------------------------------------------
def _main_kernel(rgb_ref, th_ref, a1_ref, c1_ref, w2p_ref, bias_ref, out_ref):
    e = rgb_ref[0] + th_ref[0]                                        # (3, T)
    z = jnp.maximum(
        jnp.dot(a1_ref[...], e, preferred_element_type=jnp.float32) + c1_ref[...],
        0.0)                                                          # (64, T)
    y = jnp.dot(w2p_ref[...], z, preferred_element_type=jnp.float32) + bias_ref[0]
    out_ref[...] = y[None]                                            # (1, 64, T)


def init_params(key):
    keys = jax.random.split(key, len(_PARAM_ORDER))
    w_shapes = {"wl1": (3, 64), "wl2": (64, 64), "wg1": (3, 64), "wg2": (64, 64)}

    def nrm(k, shape, scale):
        return (scale * jax.random.normal(k, shape)).astype(jnp.float32)

    params = {}
    for k, name in zip(keys, _PARAM_ORDER):
        if name.startswith("w"):
            params[name] = nrm(k, w_shapes[name], 0.25)
        elif name.startswith("g"):                       # BN gamma
            params[name] = (1.0 + nrm(k, (1, 64), 0.05)).astype(jnp.float32)
        else:                                            # conv bias / BN beta
            params[name] = nrm(k, (1, 64), 0.05)
    return params


@jax.jit
def testm_forward(x, params):
    n, c, h, w = x.shape
    hw = h * w
    cth = c - 3
    rgb = x[:, :3].reshape(n, 3, hw)
    th = x[:, 3:].reshape(n, cth, hw)

    tile = _pick_tile(hw)
    n_tiles = hw // tile
    n_pix = n * hw
    grid = (n, n_tiles)

    rgb_spec = pl.BlockSpec((1, 3, tile), lambda i, t: (i, 0, t))
    th_spec = pl.BlockSpec((1, cth, tile), lambda i, t: (i, 0, t))
    a1_spec = pl.BlockSpec((64, 3), lambda i, t: (0, 0))
    c1_spec = pl.BlockSpec((64, 1), lambda i, t: (0, 0))
    w2_spec = pl.BlockSpec((64, 64), lambda i, t: (0, 0))

    # ---- pass 1: stats of e (for the BN1 fold and the global pooled mean) ----
    sum_e, sum_ee = pl.pallas_call(
        _stats_e_kernel,
        grid=grid,
        in_specs=[rgb_spec, th_spec],
        out_specs=[pl.BlockSpec((1, 3, 1), lambda i, t: (i, 0, 0)),
                   pl.BlockSpec((1, 3, 3), lambda i, t: (i, 0, 0))],
        out_shape=[jax.ShapeDtypeStruct((n, 3, 1), jnp.float32),
                   jax.ShapeDtypeStruct((n, 3, 3), jnp.float32)],
        compiler_params=pltpu.CompilerParams(
            dimension_semantics=("parallel", "arbitrary")),
    )(rgb, th)

    # ---- fold conv1 + BN1 into one affine (A1, c1); conv bias b1 cancels ----
    mean_e = jnp.sum(sum_e, axis=0).reshape(3) / n_pix
    ee = jnp.sum(sum_ee, axis=0) / n_pix
    cov_e = ee - jnp.outer(mean_e, mean_e)                   # (3, 3)
    w1 = params["wl1"].T                                     # (64, 3)  out x in
    g1 = params["gl1"].reshape(64)
    beta1 = params["betal1"].reshape(64)
    var1 = jnp.einsum("oc,cd,od->o", w1, cov_e, w1)
    scale1 = g1 * jax.lax.rsqrt(var1 + _EPS)
    a1 = scale1[:, None] * w1                                # (64, 3)
    c1 = (beta1 - scale1 * (w1 @ mean_e)).reshape(64, 1)

    # ---- global branch on the pooled (N, 3) means (tiny; plain JAX glue) ----
    pooled = sum_e.reshape(n, 3) / hw

    def _bn_batch(v, g, b):
        mu = jnp.mean(v, axis=0, keepdims=True)
        var = jnp.mean((v - mu) ** 2, axis=0, keepdims=True)
        return g * (v - mu) * jax.lax.rsqrt(var + _EPS) + b

    gvec = pooled @ params["wg1"] + params["bg1"]
    gvec = jnp.maximum(_bn_batch(gvec, params["gg1"], params["betag1"]), 0.0)
    gvec = gvec @ params["wg2"] + params["bg2"]
    e2 = _bn_batch(gvec, params["gg2"], params["betag2"])    # (N, 64)

    # ---- pass 2: stats of h2 = W2 @ relu(A1 e + c1) for BN2 ----
    w2 = params["wl2"].T                                     # (64, 64) out x in
    sum_h, sum_hsq = pl.pallas_call(
        _stats_h_kernel,
        grid=grid,
        in_specs=[rgb_spec, th_spec, a1_spec, c1_spec, w2_spec],
        out_specs=[pl.BlockSpec((1, 64, 1), lambda i, t: (i, 0, 0)),
                   pl.BlockSpec((1, 64, 1), lambda i, t: (i, 0, 0))],
        out_shape=[jax.ShapeDtypeStruct((n, 64, 1), jnp.float32),
                   jax.ShapeDtypeStruct((n, 64, 1), jnp.float32)],
        compiler_params=pltpu.CompilerParams(
            dimension_semantics=("parallel", "arbitrary")),
    )(rgb, th, a1, c1, w2)

    # ---- fold BN2 + global-branch output; conv bias b2 cancels ----
    mean2 = jnp.sum(sum_h, axis=0).reshape(64) / n_pix
    msq2 = jnp.sum(sum_hsq, axis=0).reshape(64) / n_pix
    var2 = msq2 - mean2 * mean2
    g2 = params["gl2"].reshape(64)
    beta2 = params["betal2"].reshape(64)
    scale2 = g2 * jax.lax.rsqrt(var2 + _EPS)
    w2p = scale2[:, None] * w2                               # (64, 64)
    bias = ((beta2 - scale2 * mean2)[None, :] + e2).reshape(n, 64, 1)

    # ---- pass 3: fused normalize + add, lane-dense output ----
    out = pl.pallas_call(
        _main_kernel,
        grid=grid,
        in_specs=[rgb_spec, th_spec, a1_spec, c1_spec, w2_spec,
                  pl.BlockSpec((1, 64, 1), lambda i, t: (i, 0, 0))],
        out_specs=pl.BlockSpec((1, 64, tile), lambda i, t: (i, 0, t)),
        out_shape=jax.ShapeDtypeStruct((n, 64, hw), jnp.float32),
        compiler_params=pltpu.CompilerParams(
            dimension_semantics=("parallel", "parallel")),
    )(rgb, th, a1, c1, w2p, bias)

    return out.reshape(n, 64, h, w)                          # already NCHW


def testm_reference(x, p):
    """Pure-JAX reference of the PyTorch forward (training-mode BN)."""
    n, c, h, w = x.shape
    e = x[:, :3] + x[:, 3:]                       # (N, 3, H, W)
    e_flat = jnp.transpose(e, (0, 2, 3, 1)).reshape(n * h * w, 3)
    hi = jax.lax.Precision.HIGHEST

    def bn(v, g, b):
        mu = jnp.mean(v, axis=0, keepdims=True)
        var = jnp.mean((v - mu) ** 2, axis=0, keepdims=True)
        return g * (v - mu) / jnp.sqrt(var + _EPS) + b

    t = jnp.dot(e_flat, p["wl1"], precision=hi) + p["bl1"]
    t = jnp.maximum(bn(t, p["gl1"], p["betal1"]), 0.0)
    t = jnp.dot(t, p["wl2"], precision=hi) + p["bl2"]
    e1 = bn(t, p["gl2"], p["betal2"])
    e1 = jnp.transpose(e1.reshape(n, h, w, 64), (0, 3, 1, 2))

    pooled = jnp.mean(e, axis=(2, 3))             # (N, 3)
    g = jnp.dot(pooled, p["wg1"], precision=hi) + p["bg1"]
    g = jnp.maximum(bn(g, p["gg1"], p["betag1"]), 0.0)
    g = jnp.dot(g, p["wg2"], precision=hi) + p["bg2"]
    e2 = bn(g, p["gg2"], p["betag2"])             # (N, 64)
    return e1 + e2[:, :, None, None]


if __name__ == "__main__":
    key = jax.random.PRNGKey(0)
    kx, kp = jax.random.split(key)

    x = jax.random.normal(kx, (2, 4, 16, 16), dtype=jnp.float32)   # NCHW: 3 rgb + 1 thermal
    params = init_params(kp)

    out = testm_forward(x, params)
    out = jax.block_until_ready(out)

    assert out.shape == (2, 64, 16, 16), out.shape
    ref = testm_reference(x, params)
    err = float(jnp.max(jnp.abs(out - ref)))
    assert err < 1e-2, f"max abs err {err}"

    print("KERNEL_OK")
</pallas_src>

<mosaic_0001>
module attributes {stable_mosaic.version = 11 : i64} {
  func.func @_stats_e_kernel(%arg0: i32, %arg1: i32, %arg2: memref<1x3x256xf32, #tpu.memory_space<vmem>>, %arg3: memref<1x1x256xf32, #tpu.memory_space<vmem>>, %arg4: memref<1x3x1xf32, #tpu.memory_space<vmem>>, %arg5: memref<1x3x3xf32, #tpu.memory_space<vmem>>) attributes {dimension_semantics = [#tpu.dimension_semantics<parallel>, #tpu.dimension_semantics<arbitrary>], iteration_bounds = array<i64: 2, 1>, scalar_prefetch = 0 : i64, scratch_operands = 0 : i64, tpu.core_type = #tpu.core_type<tc>, window_params = [{transform_indices = @transform_0, window_bounds = array<i64: 1, 3, 256>}, {transform_indices = @transform_1, window_bounds = array<i64: 1, 1, 256>}, {transform_indices = @transform_2, window_bounds = array<i64: 1, 3, 1>}, {transform_indices = @transform_3, window_bounds = array<i64: 1, 3, 3>}]} {
    %c0_i32 = arith.constant 0 : i32
    %0 = arith.cmpi eq, %arg1, %c0_i32 : i32
    %1 = arith.extui %0 : i1 to i32
    %c0_i32_0 = arith.constant 0 : i32
    %2 = arith.cmpi ne, %1, %c0_i32_0 : i32
    scf.if %2 {
      %cst_19 = arith.constant 0.000000e+00 : f32
      %20 = vector.broadcast %cst_19 : f32 to vector<1x3x1xf32>
      %c0_20 = arith.constant 0 : index
      %c0_21 = arith.constant 0 : index
      %c0_22 = arith.constant 0 : index
      %21 = vector.load %arg4[%c0_20, %c0_21, %c0_22] : memref<1x3x1xf32, #tpu.memory_space<vmem>>, vector<1x3x1xf32>
      tpu.vector_store %arg4[%c0_20, %c0_21, %c0_22], %20 {strides = array<i32>} : memref<1x3x1xf32, #tpu.memory_space<vmem>>, vector<1x3x1xf32>,
      %cst_23 = arith.constant 0.000000e+00 : f32
      %22 = vector.broadcast %cst_23 : f32 to vector<1x3x3xf32>
      %c0_24 = arith.constant 0 : index
      %c0_25 = arith.constant 0 : index
      %c0_26 = arith.constant 0 : index
      %23 = vector.load %arg5[%c0_24, %c0_25, %c0_26] : memref<1x3x3xf32, #tpu.memory_space<vmem>>, vector<1x3x3xf32>
      tpu.vector_store %arg5[%c0_24, %c0_25, %c0_26], %22 {strides = array<i32>} : memref<1x3x3xf32, #tpu.memory_space<vmem>>, vector<1x3x3xf32>,
    } else {
    }
    %c0 = arith.constant 0 : index
    %c0_1 = arith.constant 0 : index
    %c0_2 = arith.constant 0 : index
    %3 = vector.load %arg2[%c0, %c0_1, %c0_2] : memref<1x3x256xf32, #tpu.memory_space<vmem>>, vector<1x3x256xf32>
    %4 = vector.shape_cast %3 : vector<1x3x256xf32> to vector<3x256xf32>
    %c0_3 = arith.constant 0 : index
    %c0_4 = arith.constant 0 : index
    %c0_5 = arith.constant 0 : index
    %5 = vector.load %arg3[%c0_3, %c0_4, %c0_5] : memref<1x1x256xf32, #tpu.memory_space<vmem>>, vector<1x1x256xf32>
    %6 = vector.shape_cast %5 : vector<1x1x256xf32> to vector<1x256xf32>
    %7 = vector.broadcast %6 : vector<1x256xf32> to vector<3x256xf32>
    %8 = arith.addf %4, %7 : vector<3x256xf32>
    %c0_6 = arith.constant 0 : index
    %c0_7 = arith.constant 0 : index
    %c0_8 = arith.constant 0 : index
    %9 = vector.load %arg4[%c0_6, %c0_7, %c0_8] : memref<1x3x1xf32, #tpu.memory_space<vmem>>, vector<1x3x1xf32>
    %cst = arith.constant dense<0.000000e+00> : vector<3xf32>
    %10 = vector.multi_reduction <add>, %8, %cst [1] : vector<3x256xf32> to vector<3xf32>
    %11 = vector.shape_cast %10 : vector<3xf32> to vector<3x1xf32>
    %12 = vector.shape_cast %11 : vector<3x1xf32> to vector<1x3x1xf32>
    %13 = arith.addf %9, %12 : vector<1x3x1xf32>
    %c0_9 = arith.constant 0 : index
    %c0_10 = arith.constant 0 : index
    %c0_11 = arith.constant 0 : index
    %14 = vector.load %arg4[%c0_9, %c0_10, %c0_11] : memref<1x3x1xf32, #tpu.memory_space<vmem>>, vector<1x3x1xf32>
    tpu.vector_store %arg4[%c0_9, %c0_10, %c0_11], %13 {strides = array<i32>} : memref<1x3x1xf32, #tpu.memory_space<vmem>>, vector<1x3x1xf32>,
    %c0_12 = arith.constant 0 : index
    %c0_13 = arith.constant 0 : index
    %c0_14 = arith.constant 0 : index
    %15 = vector.load %arg5[%c0_12, %c0_13, %c0_14] : memref<1x3x3xf32, #tpu.memory_space<vmem>>, vector<1x3x3xf32>
    "tpu.trace_start"() <{level = 10 : i32, message = "ct,dt->cd"}> : () -> ()
    %cst_15 = arith.constant dense<0.000000e+00> : vector<3x3xf32>
    %16 = tpu.matmul %8, %8, %cst_15 {dimension_numbers = #tpu.dot_dimension_numbers<[1], [1], [0], [0], [0, 0, 1, 0], [], []>} : vector<3x256xf32>, vector<3x256xf32>, vector<3x3xf32> -> vector<3x3xf32>
    "tpu.trace_stop"() : () -> ()
    %17 = vector.shape_cast %16 : vector<3x3xf32> to vector<1x3x3xf32>
    %18 = arith.addf %15, %17 : vector<1x3x3xf32>
    %c0_16 = arith.constant 0 : index
    %c0_17 = arith.constant 0 : index
    %c0_18 = arith.constant 0 : index
    %19 = vector.load %arg5[%c0_16, %c0_17, %c0_18] : memref<1x3x3xf32, #tpu.memory_space<vmem>>, vector<1x3x3xf32>
    tpu.vector_store %arg5[%c0_16, %c0_17, %c0_18], %18 {strides = array<i32>} : memref<1x3x3xf32, #tpu.memory_space<vmem>>, vector<1x3x3xf32>,
    return
  }
  func.func @transform_0(%arg0: i32, %arg1: i32) -> (i32, i32, i32) {
    %c0_i32 = arith.constant 0 : i32
    %c0_i32_0 = arith.constant 0 : i32
    return %arg0, %c0_i32, %arg1 : i32, i32, i32
  }
  func.func @transform_1(%arg0: i32, %arg1: i32) -> (i32, i32, i32) {
    %c0_i32 = arith.constant 0 : i32
    %c0_i32_0 = arith.constant 0 : i32
    return %arg0, %c0_i32, %arg1 : i32, i32, i32
  }
  func.func @transform_2(%arg0: i32, %arg1: i32) -> (i32, i32, i32) {
    %c0_i32 = arith.constant 0 : i32
    %c0_i32_0 = arith.constant 0 : i32
    %c0_i32_1 = arith.constant 0 : i32
    return %arg0, %c0_i32, %c0_i32_0 : i32, i32, i32
  }
  func.func @transform_3(%arg0: i32, %arg1: i32) -> (i32, i32, i32) {
    %c0_i32 = arith.constant 0 : i32
    %c0_i32_0 = arith.constant 0 : i32
    %c0_i32_1 = arith.constant 0 : i32
    return %arg0, %c0_i32, %c0_i32_0 : i32, i32, i32
  }
}

module attributes {stable_mosaic.version = 11 : i64} {
  func.func @_main_kernel(%arg0: i32, %arg1: i32, %arg2: memref<1x3x256xf32, #tpu.memory_space<vmem>>, %arg3: memref<1x1x256xf32, #tpu.memory_space<vmem>>, %arg4: memref<64x3xf32, #tpu.memory_space<vmem>>, %arg5: memref<64x1xf32, #tpu.memory_space<vmem>>, %arg6: memref<64x64xf32, #tpu.memory_space<vmem>>, %arg7: memref<1x64x1xf32, #tpu.memory_space<vmem>>, %arg8: memref<1x64x256xf32, #tpu.memory_space<vmem>>) attributes {dimension_semantics = [#tpu.dimension_semantics<parallel>, #tpu.dimension_semantics<parallel>], iteration_bounds = array<i64: 2, 1>, scalar_prefetch = 0 : i64, scratch_operands = 0 : i64, tpu.core_type = #tpu.core_type<tc>, window_params = [{transform_indices = @transform_0, window_bounds = array<i64: 1, 3, 256>}, {transform_indices = @transform_1, window_bounds = array<i64: 1, 1, 256>}, {pipeline_mode = #tpu.pipeline_mode<synchronous>, transform_indices = @transform_2, window_bounds = array<i64: 64, 3>}, {pipeline_mode = #tpu.pipeline_mode<synchronous>, transform_indices = @transform_3, window_bounds = array<i64: 64, 1>}, {pipeline_mode = #tpu.pipeline_mode<synchronous>, transform_indices = @transform_4, window_bounds = array<i64: 64, 64>}, {transform_indices = @transform_5, window_bounds = array<i64: 1, 64, 1>}, {transform_indices = @transform_6, window_bounds = array<i64: 1, 64, 256>}]} {
    %c0 = arith.constant 0 : index
    %c0_0 = arith.constant 0 : index
    %c0_1 = arith.constant 0 : index
    %0 = vector.load %arg2[%c0, %c0_0, %c0_1] : memref<1x3x256xf32, #tpu.memory_space<vmem>>, vector<1x3x256xf32>
    %1 = vector.shape_cast %0 : vector<1x3x256xf32> to vector<3x256xf32>
    %c0_2 = arith.constant 0 : index
    %c0_3 = arith.constant 0 : index
    %c0_4 = arith.constant 0 : index
    %2 = vector.load %arg3[%c0_2, %c0_3, %c0_4] : memref<1x1x256xf32, #tpu.memory_space<vmem>>, vector<1x1x256xf32>
    %3 = vector.shape_cast %2 : vector<1x1x256xf32> to vector<1x256xf32>
    %4 = vector.broadcast %3 : vector<1x256xf32> to vector<3x256xf32>
    %5 = arith.addf %1, %4 : vector<3x256xf32>
    %c0_5 = arith.constant 0 : index
    %c0_6 = arith.constant 0 : index
    %6 = vector.load %arg4[%c0_5, %c0_6] : memref<64x3xf32, #tpu.memory_space<vmem>>, vector<64x3xf32>
    %cst = arith.constant dense<0.000000e+00> : vector<64x256xf32>
    %7 = tpu.matmul %6, %5, %cst {dimension_numbers = #tpu.dot_dimension_numbers<[1], [0], [0], [1], [0, 0, 1, 1], [], []>} : vector<64x3xf32>, vector<3x256xf32>, vector<64x256xf32> -> vector<64x256xf32>
    %c0_7 = arith.constant 0 : index
    %c0_8 = arith.constant 0 : index
    %8 = vector.load %arg5[%c0_7, %c0_8] : memref<64x1xf32, #tpu.memory_space<vmem>>, vector<64x1xf32>
    %9 = vector.broadcast %8 : vector<64x1xf32> to vector<64x256xf32>
    %10 = arith.addf %7, %9 : vector<64x256xf32>
    %cst_9 = arith.constant 0.000000e+00 : f32
    %11 = vector.broadcast %cst_9 : f32 to vector<64x256xf32>
    %12 = arith.maximumf %10, %11 : vector<64x256xf32>
    %c0_10 = arith.constant 0 : index
    %c0_11 = arith.constant 0 : index
    %13 = vector.load %arg6[%c0_10, %c0_11] : memref<64x64xf32, #tpu.memory_space<vmem>>, vector<64x64xf32>
    %cst_12 = arith.constant dense<0.000000e+00> : vector<64x256xf32>
    %14 = tpu.matmul %13, %12, %cst_12 {dimension_numbers = #tpu.dot_dimension_numbers<[1], [0], [0], [1], [0, 0, 1, 1], [], []>} : vector<64x64xf32>, vector<64x256xf32>, vector<64x256xf32> -> vector<64x256xf32>
    %c0_13 = arith.constant 0 : index
    %c0_14 = arith.constant 0 : index
    %c0_15 = arith.constant 0 : index
    %15 = vector.load %arg7[%c0_13, %c0_14, %c0_15] : memref<1x64x1xf32, #tpu.memory_space<vmem>>, vector<1x64x1xf32>
    %16 = vector.shape_cast %15 : vector<1x64x1xf32> to vector<64x1xf32>
    %17 = vector.broadcast %16 : vector<64x1xf32> to vector<64x256xf32>
    %18 = arith.addf %14, %17 : vector<64x256xf32>
    %19 = vector.shape_cast %18 : vector<64x256xf32> to vector<1x64x256xf32>
    %c0_16 = arith.constant 0 : index
    %c0_17 = arith.constant 0 : index
    %c0_18 = arith.constant 0 : index
    %20 = vector.load %arg8[%c0_16, %c0_17, %c0_18] : memref<1x64x256xf32, #tpu.memory_space<vmem>>, vector<1x64x256xf32>
    tpu.vector_store %arg8[%c0_16, %c0_17, %c0_18], %19 {strides = array<i32>} : memref<1x64x256xf32, #tpu.memory_space<vmem>>, vector<1x64x256xf32>,
    return
  }
  func.func @transform_0(%arg0: i32, %arg1: i32) -> (i32, i32, i32) {
    %c0_i32 = arith.constant 0 : i32
    %c0_i32_0 = arith.constant 0 : i32
    return %arg0, %c0_i32, %arg1 : i32, i32, i32
  }
  func.func @transform_1(%arg0: i32, %arg1: i32) -> (i32, i32, i32) {
    %c0_i32 = arith.constant 0 : i32
    %c0_i32_0 = arith.constant 0 : i32
    return %arg0, %c0_i32, %arg1 : i32, i32, i32
  }
  func.func @transform_2(%arg0: i32, %arg1: i32) -> (i32, i32) {
    %c0_i32 = arith.constant 0 : i32
    %c0_i32_0 = arith.constant 0 : i32
    %c0_i32_1 = arith.constant 0 : i32
    return %c0_i32, %c0_i32_0 : i32, i32
  }
  func.func @transform_3(%arg0: i32, %arg1: i32) -> (i32, i32) {
    %c0_i32 = arith.constant 0 : i32
    %c0_i32_0 = arith.constant 0 : i32
    %c0_i32_1 = arith.constant 0 : i32
    return %c0_i32, %c0_i32_0 : i32, i32
  }
  func.func @transform_4(%arg0: i32, %arg1: i32) -> (i32, i32) {
    %c0_i32 = arith.constant 0 : i32
    %c0_i32_0 = arith.constant 0 : i32
    %c0_i32_1 = arith.constant 0 : i32
    return %c0_i32, %c0_i32_0 : i32, i32
  }
  func.func @transform_5(%arg0: i32, %arg1: i32) -> (i32, i32, i32) {
    %c0_i32 = arith.constant 0 : i32
    %c0_i32_0 = arith.constant 0 : i32
    %c0_i32_1 = arith.constant 0 : i32
    return %arg0, %c0_i32, %c0_i32_0 : i32, i32, i32
  }
  func.func @transform_6(%arg0: i32, %arg1: i32) -> (i32, i32, i32) {
    %c0_i32 = arith.constant 0 : i32
    %c0_i32_0 = arith.constant 0 : i32
    return %arg0, %c0_i32, %arg1 : i32, i32, i32
  }
}

module attributes {stable_mosaic.version = 11 : i64} {
  func.func @_stats_h_kernel(%arg0: i32, %arg1: i32, %arg2: memref<1x3x256xf32, #tpu.memory_space<vmem>>, %arg3: memref<1x1x256xf32, #tpu.memory_space<vmem>>, %arg4: memref<64x3xf32, #tpu.memory_space<vmem>>, %arg5: memref<64x1xf32, #tpu.memory_space<vmem>>, %arg6: memref<64x64xf32, #tpu.memory_space<vmem>>, %arg7: memref<1x64x1xf32, #tpu.memory_space<vmem>>, %arg8: memref<1x64x1xf32, #tpu.memory_space<vmem>>) attributes {dimension_semantics = [#tpu.dimension_semantics<parallel>, #tpu.dimension_semantics<arbitrary>], iteration_bounds = array<i64: 2, 1>, scalar_prefetch = 0 : i64, scratch_operands = 0 : i64, tpu.core_type = #tpu.core_type<tc>, window_params = [{transform_indices = @transform_0, window_bounds = array<i64: 1, 3, 256>}, {transform_indices = @transform_1, window_bounds = array<i64: 1, 1, 256>}, {pipeline_mode = #tpu.pipeline_mode<synchronous>, transform_indices = @transform_2, window_bounds = array<i64: 64, 3>}, {pipeline_mode = #tpu.pipeline_mode<synchronous>, transform_indices = @transform_3, window_bounds = array<i64: 64, 1>}, {pipeline_mode = #tpu.pipeline_mode<synchronous>, transform_indices = @transform_4, window_bounds = array<i64: 64, 64>}, {transform_indices = @transform_5, window_bounds = array<i64: 1, 64, 1>}, {transform_indices = @transform_6, window_bounds = array<i64: 1, 64, 1>}]} {
    %c0_i32 = arith.constant 0 : i32
    %0 = arith.cmpi eq, %arg1, %c0_i32 : i32
    %1 = arith.extui %0 : i1 to i32
    %c0_i32_0 = arith.constant 0 : i32
    %2 = arith.cmpi ne, %1, %c0_i32_0 : i32
    scf.if %2 {
      %cst_28 = arith.constant 0.000000e+00 : f32
      %31 = vector.broadcast %cst_28 : f32 to vector<1x64x1xf32>
      %c0_29 = arith.constant 0 : index
      %c0_30 = arith.constant 0 : index
      %c0_31 = arith.constant 0 : index
      %32 = vector.load %arg7[%c0_29, %c0_30, %c0_31] : memref<1x64x1xf32, #tpu.memory_space<vmem>>, vector<1x64x1xf32>
      tpu.vector_store %arg7[%c0_29, %c0_30, %c0_31], %31 {strides = array<i32>} : memref<1x64x1xf32, #tpu.memory_space<vmem>>, vector<1x64x1xf32>,
      %cst_32 = arith.constant 0.000000e+00 : f32
      %33 = vector.broadcast %cst_32 : f32 to vector<1x64x1xf32>
      %c0_33 = arith.constant 0 : index
      %c0_34 = arith.constant 0 : index
      %c0_35 = arith.constant 0 : index
      %34 = vector.load %arg8[%c0_33, %c0_34, %c0_35] : memref<1x64x1xf32, #tpu.memory_space<vmem>>, vector<1x64x1xf32>
      tpu.vector_store %arg8[%c0_33, %c0_34, %c0_35], %33 {strides = array<i32>} : memref<1x64x1xf32, #tpu.memory_space<vmem>>, vector<1x64x1xf32>,
    } else {
    }
    %c0 = arith.constant 0 : index
    %c0_1 = arith.constant 0 : index
    %c0_2 = arith.constant 0 : index
    %3 = vector.load %arg2[%c0, %c0_1, %c0_2] : memref<1x3x256xf32, #tpu.memory_space<vmem>>, vector<1x3x256xf32>
    %4 = vector.shape_cast %3 : vector<1x3x256xf32> to vector<3x256xf32>
    %c0_3 = arith.constant 0 : index
    %c0_4 = arith.constant 0 : index
    %c0_5 = arith.constant 0 : index
    %5 = vector.load %arg3[%c0_3, %c0_4, %c0_5] : memref<1x1x256xf32, #tpu.memory_space<vmem>>, vector<1x1x256xf32>
    %6 = vector.shape_cast %5 : vector<1x1x256xf32> to vector<1x256xf32>
    %7 = vector.broadcast %6 : vector<1x256xf32> to vector<3x256xf32>
    %8 = arith.addf %4, %7 : vector<3x256xf32>
    %c0_6 = arith.constant 0 : index
    %c0_7 = arith.constant 0 : index
    %9 = vector.load %arg4[%c0_6, %c0_7] : memref<64x3xf32, #tpu.memory_space<vmem>>, vector<64x3xf32>
    %cst = arith.constant dense<0.000000e+00> : vector<64x256xf32>
    %10 = tpu.matmul %9, %8, %cst {dimension_numbers = #tpu.dot_dimension_numbers<[1], [0], [0], [1], [0, 0, 1, 1], [], []>} : vector<64x3xf32>, vector<3x256xf32>, vector<64x256xf32> -> vector<64x256xf32>
    %c0_8 = arith.constant 0 : index
    %c0_9 = arith.constant 0 : index
    %11 = vector.load %arg5[%c0_8, %c0_9] : memref<64x1xf32, #tpu.memory_space<vmem>>, vector<64x1xf32>
    %12 = vector.broadcast %11 : vector<64x1xf32> to vector<64x256xf32>
    %13 = arith.addf %10, %12 : vector<64x256xf32>
    %cst_10 = arith.constant 0.000000e+00 : f32
    %14 = vector.broadcast %cst_10 : f32 to vector<64x256xf32>
    %15 = arith.maximumf %13, %14 : vector<64x256xf32>
    %c0_11 = arith.constant 0 : index
    %c0_12 = arith.constant 0 : index
    %16 = vector.load %arg6[%c0_11, %c0_12] : memref<64x64xf32, #tpu.memory_space<vmem>>, vector<64x64xf32>
    %cst_13 = arith.constant dense<0.000000e+00> : vector<64x256xf32>
    %17 = tpu.matmul %16, %15, %cst_13 {dimension_numbers = #tpu.dot_dimension_numbers<[1], [0], [0], [1], [0, 0, 1, 1], [], []>} : vector<64x64xf32>, vector<64x256xf32>, vector<64x256xf32> -> vector<64x256xf32>
    %c0_14 = arith.constant 0 : index
    %c0_15 = arith.constant 0 : index
    %c0_16 = arith.constant 0 : index
    %18 = vector.load %arg7[%c0_14, %c0_15, %c0_16] : memref<1x64x1xf32, #tpu.memory_space<vmem>>, vector<1x64x1xf32>
    %cst_17 = arith.constant dense<0.000000e+00> : vector<64xf32>
    %19 = vector.multi_reduction <add>, %17, %cst_17 [1] : vector<64x256xf32> to vector<64xf32>
    %20 = vector.shape_cast %19 : vector<64xf32> to vector<64x1xf32>
    %21 = vector.shape_cast %20 : vector<64x1xf32> to vector<1x64x1xf32>
    %22 = arith.addf %18, %21 : vector<1x64x1xf32>
    %c0_18 = arith.constant 0 : index
    %c0_19 = arith.constant 0 : index
    %c0_20 = arith.constant 0 : index
    %23 = vector.load %arg7[%c0_18, %c0_19, %c0_20] : memref<1x64x1xf32, #tpu.memory_space<vmem>>, vector<1x64x1xf32>
    tpu.vector_store %arg7[%c0_18, %c0_19, %c0_20], %22 {strides = array<i32>} : memref<1x64x1xf32, #tpu.memory_space<vmem>>, vector<1x64x1xf32>,
    %c0_21 = arith.constant 0 : index
    %c0_22 = arith.constant 0 : index
    %c0_23 = arith.constant 0 : index
    %24 = vector.load %arg8[%c0_21, %c0_22, %c0_23] : memref<1x64x1xf32, #tpu.memory_space<vmem>>, vector<1x64x1xf32>
    %25 = arith.mulf %17, %17 : vector<64x256xf32>
    %cst_24 = arith.constant dense<0.000000e+00> : vector<64xf32>
    %26 = vector.multi_reduction <add>, %25, %cst_24 [1] : vector<64x256xf32> to vector<64xf32>
    %27 = vector.shape_cast %26 : vector<64xf32> to vector<64x1xf32>
    %28 = vector.shape_cast %27 : vector<64x1xf32> to vector<1x64x1xf32>
    %29 = arith.addf %24, %28 : vector<1x64x1xf32>
    %c0_25 = arith.constant 0 : index
    %c0_26 = arith.constant 0 : index
    %c0_27 = arith.constant 0 : index
    %30 = vector.load %arg8[%c0_25, %c0_26, %c0_27] : memref<1x64x1xf32, #tpu.memory_space<vmem>>, vector<1x64x1xf32>
    tpu.vector_store %arg8[%c0_25, %c0_26, %c0_27], %29 {strides = array<i32>} : memref<1x64x1xf32, #tpu.memory_space<vmem>>, vector<1x64x1xf32>,
    return
  }
  func.func @transform_0(%arg0: i32, %arg1: i32) -> (i32, i32, i32) {
    %c0_i32 = arith.constant 0 : i32
    %c0_i32_0 = arith.constant 0 : i32
    return %arg0, %c0_i32, %arg1 : i32, i32, i32
  }
  func.func @transform_1(%arg0: i32, %arg1: i32) -> (i32, i32, i32) {
    %c0_i32 = arith.constant 0 : i32
    %c0_i32_0 = arith.constant 0 : i32
    return %arg0, %c0_i32, %arg1 : i32, i32, i32
  }
  func.func @transform_2(%arg0: i32, %arg1: i32) -> (i32, i32) {
    %c0_i32 = arith.constant 0 : i32
    %c0_i32_0 = arith.constant 0 : i32
    %c0_i32_1 = arith.constant 0 : i32
    return %c0_i32, %c0_i32_0 : i32, i32
  }
  func.func @transform_3(%arg0: i32, %arg1: i32) -> (i32, i32) {
    %c0_i32 = arith.constant 0 : i32
    %c0_i32_0 = arith.constant 0 : i32
    %c0_i32_1 = arith.constant 0 : i32
    return %c0_i32, %c0_i32_0 : i32, i32
  }
  func.func @transform_4(%arg0: i32, %arg1: i32) -> (i32, i32) {
    %c0_i32 = arith.constant 0 : i32
    %c0_i32_0 = arith.constant 0 : i32
    %c0_i32_1 = arith.constant 0 : i32
    return %c0_i32, %c0_i32_0 : i32, i32
  }
  func.func @transform_5(%arg0: i32, %arg1: i32) -> (i32, i32, i32) {
    %c0_i32 = arith.constant 0 : i32
    %c0_i32_0 = arith.constant 0 : i32
    %c0_i32_1 = arith.constant 0 : i32
    return %arg0, %c0_i32, %c0_i32_0 : i32, i32, i32
  }
  func.func @transform_6(%arg0: i32, %arg1: i32) -> (i32, i32, i32) {
    %c0_i32 = arith.constant 0 : i32
    %c0_i32_0 = arith.constant 0 : i32
    %c0_i32_1 = arith.constant 0 : i32
    return %arg0, %c0_i32, %c0_i32_0 : i32, i32, i32
  }
}

</mosaic_0001>

<llo_original>
// kernel: testm_forward.3
$region0: #{testm_forward.3}
  #allocation0 [shape = 'u32[]', space=smem, size = 0x4, offset = 0x4, fixed_abs, tag = 'smem constant byte address 0x4 - core index']
  #allocation1 [shape = 'u32[72,128]{1,0:T(1,128)}', space=vmem, size = 0x9000, scoped, tag = 'internal scratch']
  %s0 = inlined_call_operand.vmem [shape: f32[2,3,256], index: 0, kind: input, shape index: {}]
  %s1 = inlined_call_operand.vmem [shape: f32[2,1,256], index: 1, kind: input, shape index: {}]
  %s2 = inlined_call_operand.vmem [shape: f32[2,3,1], index: 2, kind: output, shape index: {0}]
  %s3 = inlined_call_operand.vmem [shape: f32[2,3,3], index: 3, kind: output, shape index: {1}]
  %4 = xla_tuple %s2, %s3
  %s5 = sld [smem:[#allocation0]]
  $region53: #{testm_forward.3} parent=0
    _
  %s7 = ssub.s32 1, %s5
  %s8 = scalar_select 0, %s7, %s5
  loop: start=0, step=1, limit=4
  $region2: #{testm_forward.3} parent=0 // loop_pre_header
    _
  $region3: #{testm_forward.3} parent=0 // loop_header
    %s10 = sphi 0, %s14
    %p11 = scmp.ge.s32.totalorder %s10, 4
    %s17 = sphi 0, %s29
    %s18 = sphi 0, %s25
    %s19 = sphi 0, %s17
    %s20 = sphi 0, %s18
    %s21 = sphi 0, %s19
    %s22 = sphi 0, %s20
    %s34 = sphi 0, %s36
    %s37 = sphi 0, %s34
    %s38 = sphi 0, %s37
    %s54 = sphi 0, %s38
    %s62 = sphi 0, %s64
    %s65 = sphi 0, %s62
    %s66 = sphi 0, %s65
    %s82 = sphi 0, %s66
    %s88 = sphi 0, %s90
    %s91 = sphi 0, %s88
    %s92 = sphi 0, %s91
    %s108 = sphi 0, %s92
    %s114 = sphi 0, %s116
    %s117 = sphi 0, %s114
    %s118 = sphi 0, %s117
    %s134 = sphi 0, %s118
  $region4: #{testm_forward.3} parent=0 // loop_header_branch
    %13 = sbr.rel (%p11) target = $region8
  $region5: #{testm_forward.3} parent=0 // loop_body
    %s15 = ssub.s32 %s10, 1
    %s16 = ssub.s32 %s10, 2
    %s23 = sadd.s32 1, %s18
    %p24 = scmp.ge.s32.totalorder %s23, 1
    %s25 = scalar_select %p24, 0, %s23
    %s26 = sadd.s32 1, %s17
    %s27 = scalar_select %p24, %s26, %s17
    %p28 = scmp.ge.s32.totalorder %s27, 2
    %s29 = scalar_select %p28, 0, %s27
    %s30 = ssub.s32 %s17, %s29
    %s31 = ssub.s32 %s18, %s25
    %s32 = sor.u32 %s30, %s31
    %p33 = scmp.eq.s32.totalorder %s32, 0
    %s35 = sadd.s32 %s34, 1
    %s36 = scalar_select %p33, %s34, %s35
    %p39 = pneg %p33
    %p40 = scmp.eq.s32.totalorder %s10, 1
    %p41 = por %p39, %p40
    %p42 = scmp.ne.s32.totalorder %s34, %s37
    %p43 = scmp.eq.s32.totalorder %s10, 0
    %p44 = por %p42, %p43
    %p45 = scmp.ne.s32.totalorder %s34, %s37
    %p46 = scmp.eq.s32.totalorder %s15, 1
    %p47 = por %p45, %p46
    %p48 = scmp.ne.s32.totalorder %s37, %s38
    %p49 = scmp.eq.s32.totalorder %s15, 0
    %p50 = por %p48, %p49
    %p51 = scmp.ne.s32.totalorder %s37, %s38
    %p52 = scmp.eq.s32.totalorder %s16, 1
    %p53 = por %p51, %p52
    %p55 = scmp.ne.s32.totalorder %s38, %s54
    %p56 = scmp.eq.s32.totalorder %s16, 0
    %p57 = por %p55, %p56
    %s58 = ssub.s32 %s17, %s29
    %s59 = ssub.s32 %s18, %s25
    %s60 = sor.u32 %s58, %s59
    %p61 = scmp.eq.s32.totalorder %s60, 0
    %s63 = sadd.s32 %s62, 1
    %s64 = scalar_select %p61, %s62, %s63
    %p67 = pneg %p61
    %p68 = scmp.eq.s32.totalorder %s10, 1
    %p69 = por %p67, %p68
    %p70 = scmp.ne.s32.totalorder %s62, %s65
    %p71 = scmp.eq.s32.totalorder %s10, 0
    %p72 = por %p70, %p71
    %p73 = scmp.ne.s32.totalorder %s62, %s65
    %p74 = scmp.eq.s32.totalorder %s15, 1
    %p75 = por %p73, %p74
    %p76 = scmp.ne.s32.totalorder %s65, %s66
    %p77 = scmp.eq.s32.totalorder %s15, 0
    %p78 = por %p76, %p77
    %p79 = scmp.ne.s32.totalorder %s65, %s66
    %p80 = scmp.eq.s32.totalorder %s16, 1
    %p81 = por %p79, %p80
    %p83 = scmp.ne.s32.totalorder %s66, %s82
    %p84 = scmp.eq.s32.totalorder %s16, 0
    %p85 = por %p83, %p84
    %s86 = ssub.s32 %s17, %s29
    %p87 = scmp.eq.s32.totalorder %s86, 0
    %s89 = sadd.s32 %s88, 1
    %s90 = scalar_select %p87, %s88, %s89
    %p93 = pneg %p87
    %p94 = scmp.eq.s32.totalorder %s10, 1
    %p95 = por %p93, %p94
    %p96 = scmp.ne.s32.totalorder %s88, %s91
    %p97 = scmp.eq.s32.totalorder %s10, 0
    %p98 = por %p96, %p97
    %p99 = scmp.ne.s32.totalorder %s88, %s91
    %p100 = scmp.eq.s32.totalorder %s15, 1
    %p101 = por %p99, %p100
    %p102 = scmp.ne.s32.totalorder %s91, %s92
    %p103 = scmp.eq.s32.totalorder %s15, 0
    %p104 = por %p102, %p103
    %p105 = scmp.ne.s32.totalorder %s91, %s92
    %p106 = scmp.eq.s32.totalorder %s16, 1
    %p107 = por %p105, %p106
    %p109 = scmp.ne.s32.totalorder %s92, %s108
    %p110 = scmp.eq.s32.totalorder %s16, 0
    %p111 = por %p109, %p110
    %s112 = ssub.s32 %s17, %s29
    %p113 = scmp.eq.s32.totalorder %s112, 0
    %s115 = sadd.s32 %s114, 1
    %s116 = scalar_select %p113, %s114, %s115
    %p119 = pneg %p113
    %p120 = scmp.eq.s32.totalorder %s10, 1
    %p121 = por %p119, %p120
    %p122 = scmp.ne.s32.totalorder %s114, %s117
    %p123 = scmp.eq.s32.totalorder %s10, 0
    %p124 = por %p122, %p123
    %p125 = scmp.ne.s32.totalorder %s114, %s117
    %p126 = scmp.eq.s32.totalorder %s15, 1
    %p127 = por %p125, %p126
    %p128 = scmp.ne.s32.totalorder %s117, %s118
    %p129 = scmp.eq.s32.totalorder %s15, 0
    %p130 = por %p128, %p129
    %p131 = scmp.ne.s32.totalorder %s117, %s118
    %p132 = scmp.eq.s32.totalorder %s16, 1
    %p133 = por %p131, %p132
    %p135 = scmp.ne.s32.totalorder %s118, %s134
    %p136 = scmp.eq.s32.totalorder %s16, 0
    %p137 = por %p135, %p136
    %p138 = scmp.le.s32.totalorder 1, %s10
    %p139 = scmp.lt.s32.totalorder %s10, 3
    %p140 = pnand %p138, %p139
    %p141 = pneg %p140
    // Predicated region
    $region9: #{testm_forward.3} parent=5 // pred_check
      _
    $region10: #{testm_forward.3} parent=5 // pred_check_branch
      %143 = sbr.rel (%p140) target = $region12
    $region11: #{testm_forward.3} parent=5 // pred_region
      %s144 = ssub.s32 %s10, 1
    $region12: #{testm_forward.3} parent=5 // pred_fallthru
      _
    %p145 = scmp.lt.s32.totalorder %s10, 2
    // Predicated region
    $region13: #{testm_forward.3} parent=5 // pred_check
      %p146 = pneg %p145
    $region14: #{testm_forward.3} parent=5 // pred_check_branch
      %148 = sbr.rel (%p146) target = $region16
    $region15: #{testm_forward.3} parent=5 // pred_region
      // Predicated region
      $region17: #{testm_forward.3} parent=15 // pred_check
        %p149 = pneg %p44
      $region18: #{testm_forward.3} parent=15 // pred_check_branch
        %151 = sbr.rel (%p149) target = $region20
      $region19: #{testm_forward.3} parent=15 // pred_region
        %s152 = smul.u32 2, %s18
        %p153 = scmp.lt.s32.totalorder %s17, 1
        %s154 = scalar_select %p153, %s17, 1
        %p155 = scmp.lt.s32.totalorder %s152, 1
        %s156 = scalar_select %p155, %s152, 1
        %s157 = smul.addr %s154, 2
        %s158 = sadd.s32 %s156, %s157
        %s159 = smul.addr %s158, 4
        %s160 = scalar_lea.vmem %s0, %s159
        %s161 = smul.u32 2, %s18
      $region20: #{testm_forward.3} parent=15 // pred_fallthru
        _
      // Predicated region
      $region21: #{testm_forward.3} parent=15 // pred_check
        %p162 = pneg %p72
      $region22: #{testm_forward.3} parent=15 // pred_check_branch
        %164 = sbr.rel (%p162) target = $region24
      $region23: #{testm_forward.3} parent=15 // pred_region
        %s165 = smul.u32 2, %s18
        %p166 = scmp.lt.s32.totalorder %s17, 1
        %s167 = scalar_select %p166, %s17, 1
        %p168 = scmp.lt.s32.totalorder %s165, 1
        %s169 = scalar_select %p168, %s165, 1
        %s170 = smul.addr %s167, 2
        %s171 = sadd.s32 %s169, %s170
        %s172 = scalar_lea.vmem %s1, %s171
        %s173 = smul.u32 2, %s18
      $region24: #{testm_forward.3} parent=15 // pred_fallthru
        _
    $region16: #{testm_forward.3} parent=5 // pred_fallthru
      _
    %p174 = scmp.le.s32.totalorder 1, %s10
    %p175 = scmp.lt.s32.totalorder %s10, 3
    %p176 = pnand %p174, %p175
    %p177 = pneg %p176
    // Predicated region
    $region25: #{testm_forward.3} parent=5 // pred_check
      _
    $region26: #{testm_forward.3} parent=5 // pred_check_branch
      %179 = sbr.rel (%p176) target = $region28
    $region27: #{testm_forward.3} parent=5 // pred_region
      %s180 = ssub.s32 %s10, 1
      %s181 = smul.u32 2, %s20
      %p182 = scmp.lt.s32.totalorder %s19, 1
      %s183 = scalar_select %p182, %s19, 1
      %p184 = scmp.lt.s32.totalorder %s181, 1
      %s185 = scalar_select %p184, %s181, 1
      %s186 = smul.addr %s183, 2
      %s187 = sadd.s32 %s185, %s186
      %s188 = smul.addr %s187, 4
      %s189 = scalar_lea.vmem %s0, %s188
      %p190 = pneg %p50
      %p191 = pneg %p47
      %s192 = smul.u32 2, %s20
      %p193 = scmp.lt.s32.totalorder %s19, 1
      %s194 = scalar_select %p193, %s19, 1
      %p195 = scmp.lt.s32.totalorder %s192, 1
      %s196 = scalar_select %p195, %s192, 1
      %s197 = smul.addr %s194, 2
      %s198 = sadd.s32 %s196, %s197
      %s199 = scalar_lea.vmem %s1, %s198
      %p200 = pneg %p78
      %p201 = pneg %p75
      %p202 = pneg %p104
      %p203 = pneg %p101
      %p204 = scmp.lt.s32.totalorder %s19, 1
      %s205 = scalar_select %p204, %s19, 1
      %s206 = smul.addr %s205, 4
      %s207 = scalar_lea.vmem %s2, %s206
      %p208 = pneg %p130
      %p209 = pneg %p127
      %p210 = scmp.lt.s32.totalorder %s19, 1
      %s211 = scalar_select %p210, %s19, 1
      %s212 = smul.addr %s211, 4
      %s213 = scalar_lea.vmem %s3, %s212
      %s214 = smul.u32 2, %s20
      %p215 = scmp.lt.s32.totalorder %s19, 1
      %s216 = scalar_select %p215, %s19, 1
      %p217 = scmp.lt.s32.totalorder %s214, 1
      %s218 = scalar_select %p217, %s214, 1
      %s219 = smul.addr %s216, 2
      %s220 = sadd.s32 %s218, %s219
      %s221 = smul.addr %s220, 4
      %s222 = scalar_lea.vmem %s0, %s221
      %s223 = smul.u32 2, %s20
      %s224 = smul.u32 2, %s20
      %p225 = scmp.lt.s32.totalorder %s19, 1
      %s226 = scalar_select %p225, %s19, 1
      %p227 = scmp.lt.s32.totalorder %s224, 1
      %s228 = scalar_select %p227, %s224, 1
      %s229 = smul.addr %s226, 2
      %s230 = sadd.s32 %s228, %s229
      %s231 = scalar_lea.vmem %s1, %s230
      %s232 = smul.u32 2, %s20
      %p233 = scmp.lt.s32.totalorder %s19, 1
      %s234 = scalar_select %p233, %s19, 1
      %s235 = smul.addr %s234, 4
      %s236 = scalar_lea.vmem %s2, %s235
      %p237 = scmp.lt.s32.totalorder %s19, 1
      %s238 = scalar_select %p237, %s19, 1
      %s239 = smul.addr %s238, 4
      %s240 = scalar_lea.vmem %s3, %s239
      %p241 = scmp.eq.s32.totalorder %s20, 0
      // Predicated region
      $region29: #{testm_forward.3} parent=27 // pred_check
        %p242 = pneg %p241
      $region30: #{testm_forward.3} parent=27 // pred_check_branch
        %244 = sbr.rel (%p242) target = $region32
      $region31: #{testm_forward.3} parent=27 // pred_region
        %vm245 = vcmask 2048
        %246 = vst.msk [vmem:[%s236] sm:$0x7] %vm245, 0.0
        %vm247 = vcmask 18432
        %248 = vst.msk [vmem:[%s240] sm:$0x7] %vm247, 0.0
      $region32: #{testm_forward.3} parent=27 // pred_fallthru
        _
      %v249 = vld [vmem:[%s222] sm:$0x77]
      %v250 = vld [vmem:[%s231] sm:$0x3]
      %v252 = vperm.slane %v250, 0
      %v253 = vperm.slane %v250, 1
      %v254 = vrot.slane %v253, 4
      %vm255 = vcmask 1043456
      %v256 = vsel %vm255, %v252, %v254
      %v258 = vadd.f32 %v249, %v256
      %v259 = vld [vmem:[%s236] sm:$0x7]
      %261 = vst [vmem:[#allocation1] ss:$2 sm:$0xff] %v258
      %v262 = vld.sshfl [vmem:[#allocation1] sm:$0xff pattern:$0x75316420]
      %v263 = vld.sshfl [vmem:[#allocation1 + $0x8] sm:$0xff pattern:$0x75316420]
      %vm266 = vcmask 1042432
      %v267 = vsel %vm266, %v262, 0.0
      %v268 = vsel %vm266, %v263, 0.0
      %v269 = vadd.f32 %v267, %v268
      %270 = vadd.xlane.f32.xlu0 %v269
      %v271 = vpop.xlane.xlu0 %270
      %v272 = vadd.f32 %v259, %v271
      %vm273 = vcmask 2048
      %274 = vst.msk [vmem:[%s236] sm:$0x7] %vm273, %v272
      %v275 = vld [vmem:[%s240] sm:$0x7]
      %276 = vst [vmem:[#allocation1] ss:$2 sm:$0xff] %v258
      %v277 = vld.sshfl [vmem:[#allocation1] sm:$0xff pattern:$0x75316420]
      %v278 = vld.sshfl [vmem:[#allocation1 + $0x8] sm:$0xff pattern:$0x75316420]
      %281 = vst [vmem:[#allocation1] ss:$2 sm:$0xff] %v258
      %v282 = vld.sshfl [vmem:[#allocation1] sm:$0xff pattern:$0x75316420]
      %v283 = vld.sshfl [vmem:[#allocation1 + $0x8] sm:$0xff pattern:$0x75316420]
      %286 = vmatpush.xpose.msra.mxu0 0.0
      %287 = vmatpush.xpose.msra.mxu0 0.0
      %288 = vmatpush.xpose.msra.mxu0 0.0
      %289 = vmatpush.xpose.msra.mxu0 0.0
      %290 = vmatpush.xpose.msra.mxu0 0.0
      %291 = vmatpush.xpose.msra.mxu0 0.0
      %292 = vmatpush.xpose.msra.mxu0 0.0
      %293 = vmatpush.xpose.msra.mxu0 0.0
      %294 = vmatpush.xpose.msra.mxu0 0.0
      %295 = vmatpush.xpose.msra.mxu0 0.0
      %296 = vmatpush.xpose.msra.mxu0 0.0
      %297 = vmatpush.xpose.msra.mxu0 0.0
      %298 = vmatpush.xpose.msra.mxu0 0.0
      %299 = vmatpush.xpose.msra.mxu0 0.0
      %300 = vmatpush.xpose.msra.mxu0 0.0
      %301 = vmatpush.xpose.msra.mxu0 %v282
      %302 = vmatmul.f32.gmra.mxu0 %v277
      %v303 = vpop.f32.mrf.mxu0
      %v304 = vadd.f32 0.0, %v303
      %305 = vdwg.mxu0
      %306 = vmatpush.xpose.msra.mxu0 0.0
      %307 = vmatpush.xpose.msra.mxu0 0.0
      %308 = vmatpush.xpose.msra.mxu0 0.0
      %309 = vmatpush.xpose.msra.mxu0 0.0
      %310 = vmatpush.xpose.msra.mxu0 0.0
      %311 = vmatpush.xpose.msra.mxu0 0.0
      %312 = vmatpush.xpose.msra.mxu0 0.0
      %313 = vmatpush.xpose.msra.mxu0 0.0
      %314 = vmatpush.xpose.msra.mxu0 0.0
      %315 = vmatpush.xpose.msra.mxu0 0.0
      %316 = vmatpush.xpose.msra.mxu0 0.0
      %317 = vmatpush.xpose.msra.mxu0 0.0
      %318 = vmatpush.xpose.msra.mxu0 0.0
      %319 = vmatpush.xpose.msra.mxu0 0.0
      %320 = vmatpush.xpose.msra.mxu0 0.0
      %321 = vmatpush.xpose.msra.mxu0 %v283
      %322 = vmatmul.f32.gmra.mxu0 %v278
      %v323 = vpop.f32.mrf.mxu0
      %v324 = vadd.f32 %v304, %v323
      %325 = vdwg.mxu0
      %v326 = vadd.f32 %v275, %v324
      %vm327 = vcmask 18432
      %328 = vst.msk [vmem:[%s240] sm:$0x7] %vm327, %v326
      %p329 = scmp.lt.s32.totalorder %s19, 1
      %s330 = scalar_select %p329, %s19, 1
      %s331 = smul.addr %s330, 4
      %s332 = scalar_lea.vmem %s2, %s331
      %p333 = scmp.lt.s32.totalorder %s19, 1
      %s334 = scalar_select %p333, %s19, 1
      %s335 = smul.addr %s334, 4
      %s336 = scalar_lea.vmem %s3, %s335
      // Predicated region
      $region33: #{testm_forward.3} parent=27 // pred_check
        %p337 = pneg %p101
      $region34: #{testm_forward.3} parent=27 // pred_check_branch
        %339 = sbr.rel (%p337) target = $region36
      $region35: #{testm_forward.3} parent=27 // pred_region
        _
      $region36: #{testm_forward.3} parent=27 // pred_fallthru
        _
      // Predicated region
      $region37: #{testm_forward.3} parent=27 // pred_check
        %p340 = pneg %p127
      $region38: #{testm_forward.3} parent=27 // pred_check_branch
        %342 = sbr.rel (%p340) target = $region40
      $region39: #{testm_forward.3} parent=27 // pred_region
        _
      $region40: #{testm_forward.3} parent=27 // pred_fallthru
        _
    $region28: #{testm_forward.3} parent=5 // pred_fallthru
      _
    %p343 = scmp.le.s32.totalorder 2, %s10
    // Predicated region
    $region41: #{testm_forward.3} parent=5 // pred_check
      %p344 = pneg %p343
    $region42: #{testm_forward.3} parent=5 // pred_check_branch
      %346 = sbr.rel (%p344) target = $region44
    $region43: #{testm_forward.3} parent=5 // pred_region
      %s347 = ssub.s32 %s10, 2
      // Predicated region
      $region45: #{testm_forward.3} parent=43 // pred_check
        %p348 = pneg %p107
      $region46: #{testm_forward.3} parent=43 // pred_check_branch
        %350 = sbr.rel (%p348) target = $region48
      $region47: #{testm_forward.3} parent=43 // pred_region
        %p351 = scmp.lt.s32.totalorder %s21, 1
        %s352 = scalar_select %p351, %s21, 1
        %s353 = smul.addr %s352, 4
        %s354 = scalar_lea.vmem %s2, %s353
      $region48: #{testm_forward.3} parent=43 // pred_fallthru
        _
      // Predicated region
      $region49: #{testm_forward.3} parent=43 // pred_check
        %p355 = pneg %p133
      $region50: #{testm_forward.3} parent=43 // pred_check_branch
        %357 = sbr.rel (%p355) target = $region52
      $region51: #{testm_forward.3} parent=43 // pred_region
        %p358 = scmp.lt.s32.totalorder %s21, 1
        %s359 = scalar_select %p358, %s21, 1
        %s360 = smul.addr %s359, 4
        %s361 = scalar_lea.vmem %s3, %s360
      $region52: #{testm_forward.3} parent=43 // pred_fallthru
        _
    $region44: #{testm_forward.3} parent=5 // pred_fallthru
      _
  $region6: #{testm_forward.3} parent=0 // loop_footer
    %s14 = sadd.s32 1, %s10
  $region7: #{testm_forward.3} parent=0 // loop_footer_branch
    %9 = sbr.rel target = $region3
  $region8: #{testm_forward.3} parent=0 // loop_exit
    _

// kernel: testm_forward.5
$region0: #{testm_forward.5}
  #allocation0 [shape = 'u32[]', space=smem, size = 0x4, offset = 0x4, fixed_abs, tag = 'smem constant byte address 0x4 - core index']
  #allocation1 [shape = 'u32[72,128]{1,0:T(1,128)}', space=vmem, size = 0x9000, scoped, tag = 'internal scratch']
  %s0 = inlined_call_operand.vmem [shape: f32[2,3,256], index: 0, kind: input, shape index: {}]
  %s1 = inlined_call_operand.vmem [shape: f32[2,1,256], index: 1, kind: input, shape index: {}]
  %s2 = inlined_call_operand.vmem [shape: f32[64,3], index: 2, kind: input, shape index: {}]
  %s3 = inlined_call_operand.vmem [shape: f32[64,1], index: 3, kind: input, shape index: {}]
  %s4 = inlined_call_operand.vmem [shape: f32[64,64], index: 4, kind: input, shape index: {}]
  %s5 = inlined_call_operand.vmem [shape: f32[2,64,1], index: 5, kind: input, shape index: {}]
  %s6 = inlined_call_operand.vmem [shape: f32[2,64,256], index: 6, kind: output, shape index: {}]
  %s7 = sld [smem:[#allocation0]]
  $region57: #{testm_forward.5} parent=0
    _
  %s9 = ssub.s32 1, %s7
  %s10 = scalar_select 0, %s9, %s7
  loop: start=0, step=1, limit=4
  $region2: #{testm_forward.5} parent=0 // loop_pre_header
    _
  $region3: #{testm_forward.5} parent=0 // loop_header
    %s12 = sphi 0, %s16
    %p13 = scmp.ge.s32.totalorder %s12, 4
    %s19 = sphi 0, %s31
    %s20 = sphi 0, %s27
    %s21 = sphi 0, %s19
    %s22 = sphi 0, %s20
    %s23 = sphi 0, %s21
    %s24 = sphi 0, %s22
    %s36 = sphi 0, %s38
    %s39 = sphi 0, %s36
    %s40 = sphi 0, %s39
    %s56 = sphi 0, %s40
    %s64 = sphi 0, %s66
    %s67 = sphi 0, %s64
    %s68 = sphi 0, %s67
    %s84 = sphi 0, %s68
    %s88 = sphi 0, %s88
    %s90 = sphi 0, %s88
    %s91 = sphi 0, %s90
    %s105 = sphi 0, %s91
    %s109 = sphi 0, %s109
    %s111 = sphi 0, %s109
    %s112 = sphi 0, %s111
    %s126 = sphi 0, %s112
    %s130 = sphi 0, %s130
    %s132 = sphi 0, %s130
    %s133 = sphi 0, %s132
    %s147 = sphi 0, %s133
    %s153 = sphi 0, %s155
    %s156 = sphi 0, %s153
    %s157 = sphi 0, %s156
    %s173 = sphi 0, %s157
    %s181 = sphi 0, %s183
    %s184 = sphi 0, %s181
    %s185 = sphi 0, %s184
    %s201 = sphi 0, %s185
  $region4: #{testm_forward.5} parent=0 // loop_header_branch
    %15 = sbr.rel (%p13) target = $region8
  $region5: #{testm_forward.5} parent=0 // loop_body
    %s17 = ssub.s32 %s12, 1
    %s18 = ssub.s32 %s12, 2
    %s25 = sadd.s32 1, %s20
    %p26 = scmp.ge.s32.totalorder %s25, 1
    %s27 = scalar_select %p26, 0, %s25
    %s28 = sadd.s32 1, %s19
    %s29 = scalar_select %p26, %s28, %s19
    %p30 = scmp.ge.s32.totalorder %s29, 2
    %s31 = scalar_select %p30, 0, %s29
    %s32 = ssub.s32 %s19, %s31
    %s33 = ssub.s32 %s20, %s27
    %s34 = sor.u32 %s32, %s33
    %p35 = scmp.eq.s32.totalorder %s34, 0
    %s37 = sadd.s32 %s36, 1
    %s38 = scalar_select %p35, %s36, %s37
    %p41 = pneg %p35
    %p42 = scmp.eq.s32.totalorder %s12, 1
    %p43 = por %p41, %p42
    %p44 = scmp.ne.s32.totalorder %s36, %s39
    %p45 = scmp.eq.s32.totalorder %s12, 0
    %p46 = por %p44, %p45
    %p47 = scmp.ne.s32.totalorder %s36, %s39
    %p48 = scmp.eq.s32.totalorder %s17, 1
    %p49 = por %p47, %p48
    %p50 = scmp.ne.s32.totalorder %s39, %s40
    %p51 = scmp.eq.s32.totalorder %s17, 0
    %p52 = por %p50, %p51
    %p53 = scmp.ne.s32.totalorder %s39, %s40
    %p54 = scmp.eq.s32.totalorder %s18, 1
    %p55 = por %p53, %p54
    %p57 = scmp.ne.s32.totalorder %s40, %s56
    %p58 = scmp.eq.s32.totalorder %s18, 0
    %p59 = por %p57, %p58
    %s60 = ssub.s32 %s19, %s31
    %s61 = ssub.s32 %s20, %s27
    %s62 = sor.u32 %s60, %s61
    %p63 = scmp.eq.s32.totalorder %s62, 0
    %s65 = sadd.s32 %s64, 1
    %s66 = scalar_select %p63, %s64, %s65
    %p69 = pneg %p63
    %p70 = scmp.eq.s32.totalorder %s12, 1
    %p71 = por %p69, %p70
    %p72 = scmp.ne.s32.totalorder %s64, %s67
    %p73 = scmp.eq.s32.totalorder %s12, 0
    %p74 = por %p72, %p73
    %p75 = scmp.ne.s32.totalorder %s64, %s67
    %p76 = scmp.eq.s32.totalorder %s17, 1
    %p77 = por %p75, %p76
    %p78 = scmp.ne.s32.totalorder %s67, %s68
    %p79 = scmp.eq.s32.totalorder %s17, 0
    %p80 = por %p78, %p79
    %p81 = scmp.ne.s32.totalorder %s67, %s68
    %p82 = scmp.eq.s32.totalorder %s18, 1
    %p83 = por %p81, %p82
    %p85 = scmp.ne.s32.totalorder %s68, %s84
    %p86 = scmp.eq.s32.totalorder %s18, 0
    %p87 = por %p85, %p86
    %s89 = sadd.s32 %s88, 1
    %p92 = scmp.eq.s32.totalorder %s12, 1
    %p93 = scmp.ne.s32.totalorder %s88, %s90
    %p94 = scmp.eq.s32.totalorder %s12, 0
    %p95 = por %p93, %p94
    %p96 = scmp.ne.s32.totalorder %s88, %s90
    %p97 = scmp.eq.s32.totalorder %s17, 1
    %p98 = por %p96, %p97
    %p99 = scmp.ne.s32.totalorder %s90, %s91
    %p100 = scmp.eq.s32.totalorder %s17, 0
    %p101 = por %p99, %p100
    %p102 = scmp.ne.s32.totalorder %s90, %s91
    %p103 = scmp.eq.s32.totalorder %s18, 1
    %p104 = por %p102, %p103
    %p106 = scmp.ne.s32.totalorder %s91, %s105
    %p107 = scmp.eq.s32.totalorder %s18, 0
    %p108 = por %p106, %p107
    %s110 = sadd.s32 %s109, 1
    %p113 = scmp.eq.s32.totalorder %s12, 1
    %p114 = scmp.ne.s32.totalorder %s109, %s111
    %p115 = scmp.eq.s32.totalorder %s12, 0
    %p116 = por %p114, %p115
    %p117 = scmp.ne.s32.totalorder %s109, %s111
    %p118 = scmp.eq.s32.totalorder %s17, 1
    %p119 = por %p117, %p118
    %p120 = scmp.ne.s32.totalorder %s111, %s112
    %p121 = scmp.eq.s32.totalorder %s17, 0
    %p122 = por %p120, %p121
    %p123 = scmp.ne.s32.totalorder %s111, %s112
    %p124 = scmp.eq.s32.totalorder %s18, 1
    %p125 = por %p123, %p124
    %p127 = scmp.ne.s32.totalorder %s112, %s126
    %p128 = scmp.eq.s32.totalorder %s18, 0
    %p129 = por %p127, %p128
    %s131 = sadd.s32 %s130, 1
    %p134 = scmp.eq.s32.totalorder %s12, 1
    %p135 = scmp.ne.s32.totalorder %s130, %s132
    %p136 = scmp.eq.s32.totalorder %s12, 0
    %p137 = por %p135, %p136
    %p138 = scmp.ne.s32.totalorder %s130, %s132
    %p139 = scmp.eq.s32.totalorder %s17, 1
    %p140 = por %p138, %p139
    %p141 = scmp.ne.s32.totalorder %s132, %s133
    %p142 = scmp.eq.s32.totalorder %s17, 0
    %p143 = por %p141, %p142
    %p144 = scmp.ne.s32.totalorder %s132, %s133
    %p145 = scmp.eq.s32.totalorder %s18, 1
    %p146 = por %p144, %p145
    %p148 = scmp.ne.s32.totalorder %s133, %s147
    %p149 = scmp.eq.s32.totalorder %s18, 0
    %p150 = por %p148, %p149
    %s151 = ssub.s32 %s19, %s31
    %p152 = scmp.eq.s32.totalorder %s151, 0
    %s154 = sadd.s32 %s153, 1
    %s155 = scalar_select %p152, %s153, %s154
    %p158 = pneg %p152
    %p159 = scmp.eq.s32.totalorder %s12, 1
    %p160 = por %p158, %p159
    %p161 = scmp.ne.s32.totalorder %s153, %s156
    %p162 = scmp.eq.s32.totalorder %s12, 0
    %p163 = por %p161, %p162
    %p164 = scmp.ne.s32.totalorder %s153, %s156
    %p165 = scmp.eq.s32.totalorder %s17, 1
    %p166 = por %p164, %p165
    %p167 = scmp.ne.s32.totalorder %s156, %s157
    %p168 = scmp.eq.s32.totalorder %s17, 0
    %p169 = por %p167, %p168
    %p170 = scmp.ne.s32.totalorder %s156, %s157
    %p171 = scmp.eq.s32.totalorder %s18, 1
    %p172 = por %p170, %p171
    %p174 = scmp.ne.s32.totalorder %s157, %s173
    %p175 = scmp.eq.s32.totalorder %s18, 0
    %p176 = por %p174, %p175
    %s177 = ssub.s32 %s19, %s31
    %s178 = ssub.s32 %s20, %s27
    %s179 = sor.u32 %s177, %s178
    %p180 = scmp.eq.s32.totalorder %s179, 0
    %s182 = sadd.s32 %s181, 1
    %s183 = scalar_select %p180, %s181, %s182
    %p186 = pneg %p180
    %p187 = scmp.eq.s32.totalorder %s12, 1
    %p188 = por %p186, %p187
    %p189 = scmp.ne.s32.totalorder %s181, %s184
    %p190 = scmp.eq.s32.totalorder %s12, 0
    %p191 = por %p189, %p190
    %p192 = scmp.ne.s32.totalorder %s181, %s184
    %p193 = scmp.eq.s32.totalorder %s17, 1
    %p194 = por %p192, %p193
    %p195 = scmp.ne.s32.totalorder %s184, %s185
    %p196 = scmp.eq.s32.totalorder %s17, 0
    %p197 = por %p195, %p196
    %p198 = scmp.ne.s32.totalorder %s184, %s185
    %p199 = scmp.eq.s32.totalorder %s18, 1
    %p200 = por %p198, %p199
    %p202 = scmp.ne.s32.totalorder %s185, %s201
    %p203 = scmp.eq.s32.totalorder %s18, 0
    %p204 = por %p202, %p203
    %p205 = scmp.le.s32.totalorder 1, %s12
    %p206 = scmp.lt.s32.totalorder %s12, 3
    %p207 = pnand %p205, %p206
    %p208 = pneg %p207
    // Predicated region
    $region9: #{testm_forward.5} parent=5 // pred_check
      _
    $region10: #{testm_forward.5} parent=5 // pred_check_branch
      %210 = sbr.rel (%p207) target = $region12
    $region11: #{testm_forward.5} parent=5 // pred_region
      %s211 = ssub.s32 %s12, 1
      // Predicated region
      $region13: #{testm_forward.5} parent=11 // pred_check
        %p212 = pneg %p101
      $region14: #{testm_forward.5} parent=11 // pred_check_branch
        %214 = sbr.rel (%p212) target = $region16
      $region15: #{testm_forward.5} parent=11 // pred_region
        _
      $region16: #{testm_forward.5} parent=11 // pred_fallthru
        _
      // Predicated region
      $region17: #{testm_forward.5} parent=11 // pred_check
        %p215 = pneg %p122
      $region18: #{testm_forward.5} parent=11 // pred_check_branch
        %217 = sbr.rel (%p215) target = $region20
      $region19: #{testm_forward.5} parent=11 // pred_region
        _
      $region20: #{testm_forward.5} parent=11 // pred_fallthru
        _
      // Predicated region
      $region21: #{testm_forward.5} parent=11 // pred_check
        %p218 = pneg %p143
      $region22: #{testm_forward.5} parent=11 // pred_check_branch
        %220 = sbr.rel (%p218) target = $region24
      $region23: #{testm_forward.5} parent=11 // pred_region
        _
      $region24: #{testm_forward.5} parent=11 // pred_fallthru
        _
    $region12: #{testm_forward.5} parent=5 // pred_fallthru
      _
    %p221 = scmp.lt.s32.totalorder %s12, 2
    // Predicated region
    $region25: #{testm_forward.5} parent=5 // pred_check
      %p222 = pneg %p221
    $region26: #{testm_forward.5} parent=5 // pred_check_branch
      %224 = sbr.rel (%p222) target = $region28
    $region27: #{testm_forward.5} parent=5 // pred_region
      // Predicated region
      $region29: #{testm_forward.5} parent=27 // pred_check
        %p225 = pneg %p46
      $region30: #{testm_forward.5} parent=27 // pred_check_branch
        %227 = sbr.rel (%p225) target = $region32
      $region31: #{testm_forward.5} parent=27 // pred_region
        %s228 = smul.u32 2, %s20
        %p229 = scmp.lt.s32.totalorder %s19, 1
        %s230 = scalar_select %p229, %s19, 1
        %p231 = scmp.lt.s32.totalorder %s228, 1
        %s232 = scalar_select %p231, %s228, 1
        %s233 = smul.addr %s230, 2
        %s234 = sadd.s32 %s232, %s233
        %s235 = smul.addr %s234, 4
        %s236 = scalar_lea.vmem %s0, %s235
        %s237 = smul.u32 2, %s20
      $region32: #{testm_forward.5} parent=27 // pred_fallthru
        _
      // Predicated region
      $region33: #{testm_forward.5} parent=27 // pred_check
        %p238 = pneg %p74
      $region34: #{testm_forward.5} parent=27 // pred_check_branch
        %240 = sbr.rel (%p238) target = $region36
      $region35: #{testm_forward.5} parent=27 // pred_region
        %s241 = smul.u32 2, %s20
        %p242 = scmp.lt.s32.totalorder %s19, 1
        %s243 = scalar_select %p242, %s19, 1
        %p244 = scmp.lt.s32.totalorder %s241, 1
        %s245 = scalar_select %p244, %s241, 1
        %s246 = smul.addr %s243, 2
        %s247 = sadd.s32 %s245, %s246
        %s248 = scalar_lea.vmem %s1, %s247
        %s249 = smul.u32 2, %s20
      $region36: #{testm_forward.5} parent=27 // pred_fallthru
        _
      // Predicated region
      $region37: #{testm_forward.5} parent=27 // pred_check
        %p250 = pneg %p163
      $region38: #{testm_forward.5} parent=27 // pred_check_branch
        %252 = sbr.rel (%p250) target = $region40
      $region39: #{testm_forward.5} parent=27 // pred_region
        %p253 = scmp.lt.s32.totalorder %s19, 1
        %s254 = scalar_select %p253, %s19, 1
        %s255 = smul.addr %s254, 8
        %s256 = smul.addr %s255, 8
        %s257 = scalar_lea.vmem %s5, %s256
      $region40: #{testm_forward.5} parent=27 // pred_fallthru
        _
    $region28: #{testm_forward.5} parent=5 // pred_fallthru
      _
    %p258 = scmp.le.s32.totalorder 1, %s12
    %p259 = scmp.lt.s32.totalorder %s12, 3
    %p260 = pnand %p258, %p259
    %p261 = pneg %p260
    // Predicated region
    $region41: #{testm_forward.5} parent=5 // pred_check
      _
    $region42: #{testm_forward.5} parent=5 // pred_check_branch
      %263 = sbr.rel (%p260) target = $region44
    $region43: #{testm_forward.5} parent=5 // pred_region
      %s264 = ssub.s32 %s12, 1
      %s265 = smul.u32 2, %s22
      %p266 = scmp.lt.s32.totalorder %s21, 1
      %s267 = scalar_select %p266, %s21, 1
      %p268 = scmp.lt.s32.totalorder %s265, 1
      %s269 = scalar_select %p268, %s265, 1
      %s270 = smul.addr %s267, 2
      %s271 = sadd.s32 %s269, %s270
      %s272 = smul.addr %s271, 4
      %s273 = scalar_lea.vmem %s0, %s272
      %p274 = pneg %p52
      %p275 = pneg %p49
      %s276 = smul.u32 2, %s22
      %p277 = scmp.lt.s32.totalorder %s21, 1
      %s278 = scalar_select %p277, %s21, 1
      %p279 = scmp.lt.s32.totalorder %s276, 1
      %s280 = scalar_select %p279, %s276, 1
      %s281 = smul.addr %s278, 2
      %s282 = sadd.s32 %s280, %s281
      %s283 = scalar_lea.vmem %s1, %s282
      %p284 = pneg %p80
      %p285 = pneg %p77
      %p286 = pneg %p101
      %p287 = pneg %p98
      %p288 = pneg %p122
      %p289 = pneg %p119
      %p290 = pneg %p143
      %p291 = pneg %p140
      %p292 = scmp.lt.s32.totalorder %s21, 1
      %s293 = scalar_select %p292, %s21, 1
      %s294 = smul.addr %s293, 8
      %s295 = smul.addr %s294, 8
      %s296 = scalar_lea.vmem %s5, %s295
      %p297 = pneg %p169
      %p298 = pneg %p166
      %p299 = pneg %p197
      %p300 = pneg %p194
      %s301 = smul.u32 2, %s22
      %p302 = scmp.lt.s32.totalorder %s21, 1
      %s303 = scalar_select %p302, %s21, 1
      %p304 = scmp.lt.s32.totalorder %s301, 1
      %s305 = scalar_select %p304, %s301, 1
      %s306 = smul.addr %s303, 16
      %s307 = sadd.s32 %s305, %s306
      %s308 = smul.addr %s307, 8
      %s309 = scalar_lea.vmem %s6, %s308
      %s310 = smul.u32 2, %s22
      %p311 = scmp.lt.s32.totalorder %s21, 1
      %s312 = scalar_select %p311, %s21, 1
      %p313 = scmp.lt.s32.totalorder %s310, 1
      %s314 = scalar_select %p313, %s310, 1
      %s315 = smul.addr %s312, 2
      %s316 = sadd.s32 %s314, %s315
      %s317 = smul.addr %s316, 4
      %s318 = scalar_lea.vmem %s0, %s317
      %s319 = smul.u32 2, %s22
      %s320 = smul.u32 2, %s22
      %p321 = scmp.lt.s32.totalorder %s21, 1
      %s322 = scalar_select %p321, %s21, 1
      %p323 = scmp.lt.s32.totalorder %s320, 1
      %s324 = scalar_select %p323, %s320, 1
      %s325 = smul.addr %s322, 2
      %s326 = sadd.s32 %s324, %s325
      %s327 = scalar_lea.vmem %s1, %s326
      %s328 = smul.u32 2, %s22
      %p329 = scmp.lt.s32.totalorder %s21, 1
      %s330 = scalar_select %p329, %s21, 1
      %s331 = smul.addr %s330, 8
      %s332 = smul.addr %s331, 8
      %s333 = scalar_lea.vmem %s5, %s332
      %s334 = smul.u32 2, %s22
      %p335 = scmp.lt.s32.totalorder %s21, 1
      %s336 = scalar_select %p335, %s21, 1
      %p337 = scmp.lt.s32.totalorder %s334, 1
      %s338 = scalar_select %p337, %s334, 1
      %s339 = smul.addr %s336, 16
      %s340 = sadd.s32 %s338, %s339
      %s341 = smul.addr %s340, 8
      %s342 = scalar_lea.vmem %s6, %s341
      %s343 = smul.u32 2, %s22
      %v344 = vld [vmem:[%s318] sm:$0x77]
      %v345 = vld [vmem:[%s327] sm:$0x3]
      %v347 = vperm.slane %v345, 0
      %v348 = vperm.slane %v345, 1
      %v349 = vrot.slane %v348, 4
      %vm350 = vcmask 1043456
      %v351 = vsel %vm350, %v347, %v349
      %v353 = vadd.f32 %v344, %v351
      %v354 = vld [vmem:[%s2] sm:$0xff]
      %v355 = vld [vmem:[%s2 + $0x8] sm:$0xff]
      %v356 = vld [vmem:[%s2 + $0x10] sm:$0xff]
      %v357 = vld [vmem:[%s2 + $0x18] sm:$0xff]
      %v358 = vld [vmem:[%s2 + $0x20] sm:$0xff]
      %v359 = vld [vmem:[%s2 + $0x28] sm:$0xff]
      %v360 = vld [vmem:[%s2 + $0x30] sm:$0xff]
      %v361 = vld [vmem:[%s2 + $0x38] sm:$0xff]
      %v362 = vld [vmem:[%s3] sm:$0xff]
      %v363 = vld [vmem:[%s3 + $0x8] sm:$0xff]
      %v364 = vld [vmem:[%s3 + $0x10] sm:$0xff]
      %v365 = vld [vmem:[%s3 + $0x18] sm:$0xff]
      %v366 = vld [vmem:[%s3 + $0x20] sm:$0xff]
      %v367 = vld [vmem:[%s3 + $0x28] sm:$0xff]
      %v368 = vld [vmem:[%s3 + $0x30] sm:$0xff]
      %v369 = vld [vmem:[%s3 + $0x38] sm:$0xff]
      %371 = vset.pattern.permute.xlu0 0
      %372 = vperm.xlu0 %371, %v362
      %v373 = vpop.permute.xlu0 %372
      %376 = vset.pattern.permute.xlu0 0
      %377 = vperm.xlu0 %376, %v363
      %v378 = vpop.permute.xlu0 %377
      %381 = vset.pattern.permute.xlu0 0
      %382 = vperm.xlu0 %381, %v364
      %v383 = vpop.permute.xlu0 %382
      %386 = vset.pattern.permute.xlu0 0
      %387 = vperm.xlu0 %386, %v365
      %v388 = vpop.permute.xlu0 %387
      %391 = vset.pattern.permute.xlu0 0
      %392 = vperm.xlu0 %391, %v366
      %v393 = vpop.permute.xlu0 %392
      %396 = vset.pattern.permute.xlu0 0
      %397 = vperm.xlu0 %396, %v367
      %v398 = vpop.permute.xlu0 %397
      %401 = vset.pattern.permute.xlu0 0
      %402 = vperm.xlu0 %401, %v368
      %v403 = vpop.permute.xlu0 %402
      %406 = vset.pattern.permute.xlu0 0
      %407 = vperm.xlu0 %406, %v369
      %v408 = vpop.permute.xlu0 %407
      %411 = vst [vmem:[#allocation1] ss:$2 sm:$0xff] %v353
      %v412 = vld.sshfl [vmem:[#allocation1] sm:$0xff pattern:$0x75316420]
      %v413 = vld.sshfl [vmem:[#allocation1 + $0x8] sm:$0xff pattern:$0x75316420]
      %vm414 = vcmask 23552
      %v416 = vsel %vm414, %v354, 0
      %v419 = vsel %vm414, %v355, 0
      %v422 = vsel %vm414, %v356, 0
      %v425 = vsel %vm414, %v357, 0
      %v428 = vsel %vm414, %v358, 0
      %v431 = vsel %vm414, %v359, 0
      %v434 = vsel %vm414, %v360, 0
      %v437 = vsel %vm414, %v361, 0
      %vm439 = vcmask 1042432
      %v440 = vsel %vm439, %v412, 0
      %v442 = vsel %vm439, %v413, 0
      %444 = vmatpush.msra.mxu0 0.0
      %445 = vmatpush.msra.mxu0 0.0
      %446 = vmatpush.msra.mxu0 0.0
      %447 = vmatpush.msra.mxu0 0.0
      %448 = vmatpush.msra.mxu0 0.0
      %449 = vmatpush.msra.mxu0 0.0
      %450 = vmatpush.msra.mxu0 0.0
      %451 = vmatpush.msra.mxu0 0.0
      %452 = vmatpush.msra.mxu0 0.0
      %453 = vmatpush.msra.mxu0 0.0
      %454 = vmatpush.msra.mxu0 0.0
      %455 = vmatpush.msra.mxu0 0.0
      %456 = vmatpush.msra.mxu0 0.0
      %457 = vmatpush.msra.mxu0 0.0
      %458 = vmatpush.msra.mxu0 0.0
      %459 = vmatpush.msra.mxu0 %v440
      %460 = vmatmul.f32.gmra.mxu0 %v416
      %v461 = vpop.f32.mrf.mxu0
      %v462 = vadd.f32 %v373, %v461
      %463 = vmatmul.f32.gmra.mxu0 %v419
      %v464 = vpop.f32.mrf.mxu0
      %v465 = vadd.f32 %v378, %v464
      %466 = vmatmul.f32.gmra.mxu0 %v422
      %v467 = vpop.f32.mrf.mxu0
      %v468 = vadd.f32 %v383, %v467
      %469 = vmatmul.f32.gmra.mxu0 %v425
      %v470 = vpop.f32.mrf.mxu0
      %v471 = vadd.f32 %v388, %v470
      %472 = vmatmul.f32.gmra.mxu0 %v428
      %v473 = vpop.f32.mrf.mxu0
      %v474 = vadd.f32 %v393, %v473
      %475 = vmatmul.f32.gmra.mxu0 %v431
      %v476 = vpop.f32.mrf.mxu0
      %v477 = vadd.f32 %v398, %v476
      %478 = vmatmul.f32.gmra.mxu0 %v434
      %v479 = vpop.f32.mrf.mxu0
      %v480 = vadd.f32 %v403, %v479
      %481 = vmatmul.f32.gmra.mxu0 %v437
      %v482 = vpop.f32.mrf.mxu0
      %v483 = vadd.f32 %v408, %v482
      %484 = vdwg.mxu0
      %485 = vmatpush.msra.mxu0 0.0
      %486 = vmatpush.msra.mxu0 0.0
      %487 = vmatpush.msra.mxu0 0.0
      %488 = vmatpush.msra.mxu0 0.0
      %489 = vmatpush.msra.mxu0 0.0
      %490 = vmatpush.msra.mxu0 0.0
      %491 = vmatpush.msra.mxu0 0.0
      %492 = vmatpush.msra.mxu0 0.0
      %493 = vmatpush.msra.mxu0 0.0
      %494 = vmatpush.msra.mxu0 0.0
      %495 = vmatpush.msra.mxu0 0.0
      %496 = vmatpush.msra.mxu0 0.0
      %497 = vmatpush.msra.mxu0 0.0
      %498 = vmatpush.msra.mxu0 0.0
      %499 = vmatpush.msra.mxu0 0.0
      %500 = vmatpush.msra.mxu0 %v442
      %501 = vmatmul.f32.gmra.mxu0 %v416
      %v502 = vpop.f32.mrf.mxu0
      %v503 = vadd.f32 %v373, %v502
      %504 = vmatmul.f32.gmra.mxu0 %v419
      %v505 = vpop.f32.mrf.mxu0
      %v506 = vadd.f32 %v378, %v505
      %507 = vmatmul.f32.gmra.mxu0 %v422
      %v508 = vpop.f32.mrf.mxu0
      %v509 = vadd.f32 %v383, %v508
      %510 = vmatmul.f32.gmra.mxu0 %v425
      %v511 = vpop.f32.mrf.mxu0
      %v512 = vadd.f32 %v388, %v511
      %513 = vmatmul.f32.gmra.mxu0 %v428
      %v514 = vpop.f32.mrf.mxu0
      %v515 = vadd.f32 %v393, %v514
      %516 = vmatmul.f32.gmra.mxu0 %v431
      %v517 = vpop.f32.mrf.mxu0
      %v518 = vadd.f32 %v398, %v517
      %519 = vmatmul.f32.gmra.mxu0 %v434
      %v520 = vpop.f32.mrf.mxu0
      %v521 = vadd.f32 %v403, %v520
      %522 = vmatmul.f32.gmra.mxu0 %v437
      %v523 = vpop.f32.mrf.mxu0
      %v524 = vadd.f32 %v408, %v523
      %525 = vdwg.mxu0
      %v526 = vmax.f32 %v462, 0.0
      %v527 = vmax.f32 %v503, 0.0
      %v528 = vmax.f32 %v465, 0.0
      %v529 = vmax.f32 %v506, 0.0
      %v530 = vmax.f32 %v468, 0.0
      %v531 = vmax.f32 %v509, 0.0
      %v532 = vmax.f32 %v471, 0.0
      %v533 = vmax.f32 %v512, 0.0
      %v534 = vmax.f32 %v474, 0.0
      %v535 = vmax.f32 %v515, 0.0
      %v536 = vmax.f32 %v477, 0.0
      %v537 = vmax.f32 %v518, 0.0
      %v538 = vmax.f32 %v480, 0.0
      %v539 = vmax.f32 %v521, 0.0
      %v540 = vmax.f32 %v483, 0.0
      %v541 = vmax.f32 %v524, 0.0
      %v542 = vld [vmem:[%s4] sm:$0xff]
      %v543 = vld [vmem:[%s4 + $0x8] sm:$0xff]
      %v544 = vld [vmem:[%s4 + $0x10] sm:$0xff]
      %v545 = vld [vmem:[%s4 + $0x18] sm:$0xff]
      %v546 = vld [vmem:[%s4 + $0x20] sm:$0xff]
      %v547 = vld [vmem:[%s4 + $0x28] sm:$0xff]
      %v548 = vld [vmem:[%s4 + $0x30] sm:$0xff]
      %v549 = vld [vmem:[%s4 + $0x38] sm:$0xff]
      %v550 = vld [vmem:[%s333] sm:$0xff]
      %v551 = vld [vmem:[%s333 + $0x8] sm:$0xff]
      %v552 = vld [vmem:[%s333 + $0x10] sm:$0xff]
      %v553 = vld [vmem:[%s333 + $0x18] sm:$0xff]
      %v554 = vld [vmem:[%s333 + $0x20] sm:$0xff]
      %v555 = vld [vmem:[%s333 + $0x28] sm:$0xff]
      %v556 = vld [vmem:[%s333 + $0x30] sm:$0xff]
      %v557 = vld [vmem:[%s333 + $0x38] sm:$0xff]
      %559 = vset.pattern.permute.xlu0 0
      %560 = vperm.xlu0 %559, %v550
      %v561 = vpop.permute.xlu0 %560
      %564 = vset.pattern.permute.xlu0 0
      %565 = vperm.xlu0 %564, %v551
      %v566 = vpop.permute.xlu0 %565
      %569 = vset.pattern.permute.xlu0 0
      %570 = vperm.xlu0 %569, %v552
      %v571 = vpop.permute.xlu0 %570
      %574 = vset.pattern.permute.xlu0 0
      %575 = vperm.xlu0 %574, %v553
      %v576 = vpop.permute.xlu0 %575
      %579 = vset.pattern.permute.xlu0 0
      %580 = vperm.xlu0 %579, %v554
      %v581 = vpop.permute.xlu0 %580
      %584 = vset.pattern.permute.xlu0 0
      %585 = vperm.xlu0 %584, %v555
      %v586 = vpop.permute.xlu0 %585
      %589 = vset.pattern.permute.xlu0 0
      %590 = vperm.xlu0 %589, %v556
      %v591 = vpop.permute.xlu0 %590
      %594 = vset.pattern.permute.xlu0 0
      %595 = vperm.xlu0 %594, %v557
      %v596 = vpop.permute.xlu0 %595
      %vm598 = vcmask 523264
      %v600 = vsel %vm598, %v542, 0
      %v603 = vsel %vm598, %v543, 0
      %v606 = vsel %vm598, %v544, 0
      %v609 = vsel %vm598, %v545, 0
      %v612 = vsel %vm598, %v546, 0
      %v615 = vsel %vm598, %v547, 0
      %v618 = vsel %vm598, %v548, 0
      %v621 = vsel %vm598, %v549, 0
      %623 = vmatpush.msra.mxu0 0.0
      %624 = vmatpush.msra.mxu0 0.0
      %625 = vmatpush.msra.mxu0 0.0
      %626 = vmatpush.msra.mxu0 0.0
      %627 = vmatpush.msra.mxu0 0.0
      %628 = vmatpush.msra.mxu0 0.0
      %629 = vmatpush.msra.mxu0 0.0
      %630 = vmatpush.msra.mxu0 0.0
      %631 = vmatpush.msra.mxu0 %v540
      %632 = vmatpush.msra.mxu0 %v538
      %633 = vmatpush.msra.mxu0 %v536
      %634 = vmatpush.msra.mxu0 %v534
      %635 = vmatpush.msra.mxu0 %v532
      %636 = vmatpush.msra.mxu0 %v530
      %637 = vmatpush.msra.mxu0 %v528
      %638 = vmatpush.msra.mxu0 %v526
      %639 = vmatmul.f32.gmra.mxu0 %v600
      %v640 = vpop.f32.mrf.mxu0
      %v641 = vadd.f32 %v561, %v640
      %642 = vmatmul.f32.gmra.mxu0 %v603
      %v643 = vpop.f32.mrf.mxu0
      %v644 = vadd.f32 %v566, %v643
      %645 = vmatmul.f32.gmra.mxu0 %v606
      %v646 = vpop.f32.mrf.mxu0
      %v647 = vadd.f32 %v571, %v646
      %648 = vmatmul.f32.gmra.mxu0 %v609
      %v649 = vpop.f32.mrf.mxu0
      %v650 = vadd.f32 %v576, %v649
      %651 = vmatmul.f32.gmra.mxu0 %v612
      %v652 = vpop.f32.mrf.mxu0
      %v653 = vadd.f32 %v581, %v652
      %654 = vmatmul.f32.gmra.mxu0 %v615
      %v655 = vpop.f32.mrf.mxu0
      %v656 = vadd.f32 %v586, %v655
      %657 = vmatmul.f32.gmra.mxu0 %v618
      %v658 = vpop.f32.mrf.mxu0
      %v659 = vadd.f32 %v591, %v658
      %660 = vmatmul.f32.gmra.mxu0 %v621
      %v661 = vpop.f32.mrf.mxu0
      %v662 = vadd.f32 %v596, %v661
      %663 = vdwg.mxu0
      %664 = vmatpush.msra.mxu0 0.0
      %665 = vmatpush.msra.mxu0 0.0
      %666 = vmatpush.msra.mxu0 0.0
      %667 = vmatpush.msra.mxu0 0.0
      %668 = vmatpush.msra.mxu0 0.0
      %669 = vmatpush.msra.mxu0 0.0
      %670 = vmatpush.msra.mxu0 0.0
      %671 = vmatpush.msra.mxu0 0.0
      %672 = vmatpush.msra.mxu0 %v541
      %673 = vmatpush.msra.mxu0 %v539
      %674 = vmatpush.msra.mxu0 %v537
      %675 = vmatpush.msra.mxu0 %v535
      %676 = vmatpush.msra.mxu0 %v533
      %677 = vmatpush.msra.mxu0 %v531
      %678 = vmatpush.msra.mxu0 %v529
      %679 = vmatpush.msra.mxu0 %v527
      %680 = vmatmul.f32.gmra.mxu0 %v600
      %v681 = vpop.f32.mrf.mxu0
      %v682 = vadd.f32 %v561, %v681
      %683 = vmatmul.f32.gmra.mxu0 %v603
      %v684 = vpop.f32.mrf.mxu0
      %v685 = vadd.f32 %v566, %v684
      %686 = vmatmul.f32.gmra.mxu0 %v606
      %v687 = vpop.f32.mrf.mxu0
      %v688 = vadd.f32 %v571, %v687
      %689 = vmatmul.f32.gmra.mxu0 %v609
      %v690 = vpop.f32.mrf.mxu0
      %v691 = vadd.f32 %v576, %v690
      %692 = vmatmul.f32.gmra.mxu0 %v612
      %v693 = vpop.f32.mrf.mxu0
      %v694 = vadd.f32 %v581, %v693
      %695 = vmatmul.f32.gmra.mxu0 %v615
      %v696 = vpop.f32.mrf.mxu0
      %v697 = vadd.f32 %v586, %v696
      %698 = vmatmul.f32.gmra.mxu0 %v618
      %v699 = vpop.f32.mrf.mxu0
      %v700 = vadd.f32 %v591, %v699
      %701 = vmatmul.f32.gmra.mxu0 %v621
      %v702 = vpop.f32.mrf.mxu0
      %v703 = vadd.f32 %v596, %v702
      %704 = vdwg.mxu0
      %705 = vst [vmem:[%s342] sm:$0xff] %v641
      %706 = vst [vmem:[%s342 + $0x8] sm:$0xff] %v682
      %707 = vst [vmem:[%s342 + $0x10] sm:$0xff] %v644
      %708 = vst [vmem:[%s342 + $0x18] sm:$0xff] %v685
      %709 = vst [vmem:[%s342 + $0x20] sm:$0xff] %v647
      %710 = vst [vmem:[%s342 + $0x28] sm:$0xff] %v688
      %711 = vst [vmem:[%s342 + $0x30] sm:$0xff] %v650
      %712 = vst [vmem:[%s342 + $0x38] sm:$0xff] %v691
      %713 = vst [vmem:[%s342 + $0x40] sm:$0xff] %v653
      %714 = vst [vmem:[%s342 + $0x48] sm:$0xff] %v694
      %715 = vst [vmem:[%s342 + $0x50] sm:$0xff] %v656
      %716 = vst [vmem:[%s342 + $0x58] sm:$0xff] %v697
      %717 = vst [vmem:[%s342 + $0x60] sm:$0xff] %v659
      %718 = vst [vmem:[%s342 + $0x68] sm:$0xff] %v700
      %719 = vst [vmem:[%s342 + $0x70] sm:$0xff] %v662
      %720 = vst [vmem:[%s342 + $0x78] sm:$0xff] %v703
      %s721 = smul.u32 2, %s22
      %p722 = scmp.lt.s32.totalorder %s21, 1
      %s723 = scalar_select %p722, %s21, 1
      %p724 = scmp.lt.s32.totalorder %s721, 1
      %s725 = scalar_select %p724, %s721, 1
      %s726 = smul.addr %s723, 16
      %s727 = sadd.s32 %s725, %s726
      %s728 = smul.addr %s727, 8
      %s729 = scalar_lea.vmem %s6, %s728
      // Predicated region
      $region45: #{testm_forward.5} parent=43 // pred_check
        %p730 = pneg %p194
      $region46: #{testm_forward.5} parent=43 // pred_check_branch
        %732 = sbr.rel (%p730) target = $region48
      $region47: #{testm_forward.5} parent=43 // pred_region
        %s733 = smul.u32 2, %s22
      $region48: #{testm_forward.5} parent=43 // pred_fallthru
        _
    $region44: #{testm_forward.5} parent=5 // pred_fallthru
      _
    %p734 = scmp.le.s32.totalorder 2, %s12
    // Predicated region
    $region49: #{testm_forward.5} parent=5 // pred_check
      %p735 = pneg %p734
    $region50: #{testm_forward.5} parent=5 // pred_check_branch
      %737 = sbr.rel (%p735) target = $region52
    $region51: #{testm_forward.5} parent=5 // pred_region
      %s738 = ssub.s32 %s12, 2
      // Predicated region
      $region53: #{testm_forward.5} parent=51 // pred_check
        %p739 = pneg %p200
      $region54: #{testm_forward.5} parent=51 // pred_check_branch
        %741 = sbr.rel (%p739) target = $region56
      $region55: #{testm_forward.5} parent=51 // pred_region
        %s742 = smul.u32 2, %s24
        %p743 = scmp.lt.s32.totalorder %s23, 1
        %s744 = scalar_select %p743, %s23, 1
        %p745 = scmp.lt.s32.totalorder %s742, 1
        %s746 = scalar_select %p745, %s742, 1
        %s747 = smul.addr %s744, 16
        %s748 = sadd.s32 %s746, %s747
        %s749 = smul.addr %s748, 8
        %s750 = scalar_lea.vmem %s6, %s749
      $region56: #{testm_forward.5} parent=51 // pred_fallthru
        _
    $region52: #{testm_forward.5} parent=5 // pred_fallthru
      _
  $region6: #{testm_forward.5} parent=0 // loop_footer
    %s16 = sadd.s32 1, %s12
  $region7: #{testm_forward.5} parent=0 // loop_footer_branch
    %11 = sbr.rel target = $region3
  $region8: #{testm_forward.5} parent=0 // loop_exit
    _

// kernel: testm_forward.4
$region0: #{testm_forward.4}
  #allocation0 [shape = 'u32[]', space=smem, size = 0x4, offset = 0x4, fixed_abs, tag = 'smem constant byte address 0x4 - core index']
  #allocation1 [shape = 'u32[72,128]{1,0:T(1,128)}', space=vmem, size = 0x9000, scoped, tag = 'internal scratch']
  %s0 = inlined_call_operand.vmem [shape: f32[2,3,256], index: 0, kind: input, shape index: {}]
  %s1 = inlined_call_operand.vmem [shape: f32[2,1,256], index: 1, kind: input, shape index: {}]
  %s2 = inlined_call_operand.vmem [shape: f32[64,3], index: 2, kind: input, shape index: {}]
  %s3 = inlined_call_operand.vmem [shape: f32[64,1], index: 3, kind: input, shape index: {}]
  %s4 = inlined_call_operand.vmem [shape: f32[64,64], index: 4, kind: input, shape index: {}]
  %s5 = inlined_call_operand.vmem [shape: f32[2,64,1], index: 5, kind: output, shape index: {0}]
  %s6 = inlined_call_operand.vmem [shape: f32[2,64,1], index: 6, kind: output, shape index: {1}]
  %7 = xla_tuple %s5, %s6
  %s8 = sld [smem:[#allocation0]]
  $region65: #{testm_forward.4} parent=0
    _
  %s10 = ssub.s32 1, %s8
  %s11 = scalar_select 0, %s10, %s8
  loop: start=0, step=1, limit=4
  $region2: #{testm_forward.4} parent=0 // loop_pre_header
    _
  $region3: #{testm_forward.4} parent=0 // loop_header
    %s13 = sphi 0, %s17
    %p14 = scmp.ge.s32.totalorder %s13, 4
    %s20 = sphi 0, %s32
    %s21 = sphi 0, %s28
    %s22 = sphi 0, %s20
    %s23 = sphi 0, %s21
    %s24 = sphi 0, %s22
    %s25 = sphi 0, %s23
    %s37 = sphi 0, %s39
    %s40 = sphi 0, %s37
    %s41 = sphi 0, %s40
    %s57 = sphi 0, %s41
    %s65 = sphi 0, %s67
    %s68 = sphi 0, %s65
    %s69 = sphi 0, %s68
    %s85 = sphi 0, %s69
    %s89 = sphi 0, %s89
    %s91 = sphi 0, %s89
    %s92 = sphi 0, %s91
    %s106 = sphi 0, %s92
    %s110 = sphi 0, %s110
    %s112 = sphi 0, %s110
    %s113 = sphi 0, %s112
    %s127 = sphi 0, %s113
    %s131 = sphi 0, %s131
    %s133 = sphi 0, %s131
    %s134 = sphi 0, %s133
    %s148 = sphi 0, %s134
    %s154 = sphi 0, %s156
    %s157 = sphi 0, %s154
    %s158 = sphi 0, %s157
    %s174 = sphi 0, %s158
    %s180 = sphi 0, %s182
    %s183 = sphi 0, %s180
    %s184 = sphi 0, %s183
    %s200 = sphi 0, %s184
  $region4: #{testm_forward.4} parent=0 // loop_header_branch
    %16 = sbr.rel (%p14) target = $region8
  $region5: #{testm_forward.4} parent=0 // loop_body
    %s18 = ssub.s32 %s13, 1
    %s19 = ssub.s32 %s13, 2
    %s26 = sadd.s32 1, %s21
    %p27 = scmp.ge.s32.totalorder %s26, 1
    %s28 = scalar_select %p27, 0, %s26
    %s29 = sadd.s32 1, %s20
    %s30 = scalar_select %p27, %s29, %s20
    %p31 = scmp.ge.s32.totalorder %s30, 2
    %s32 = scalar_select %p31, 0, %s30
    %s33 = ssub.s32 %s20, %s32
    %s34 = ssub.s32 %s21, %s28
    %s35 = sor.u32 %s33, %s34
    %p36 = scmp.eq.s32.totalorder %s35, 0
    %s38 = sadd.s32 %s37, 1
    %s39 = scalar_select %p36, %s37, %s38
    %p42 = pneg %p36
    %p43 = scmp.eq.s32.totalorder %s13, 1
    %p44 = por %p42, %p43
    %p45 = scmp.ne.s32.totalorder %s37, %s40
    %p46 = scmp.eq.s32.totalorder %s13, 0
    %p47 = por %p45, %p46
    %p48 = scmp.ne.s32.totalorder %s37, %s40
    %p49 = scmp.eq.s32.totalorder %s18, 1
    %p50 = por %p48, %p49
    %p51 = scmp.ne.s32.totalorder %s40, %s41
    %p52 = scmp.eq.s32.totalorder %s18, 0
    %p53 = por %p51, %p52
    %p54 = scmp.ne.s32.totalorder %s40, %s41
    %p55 = scmp.eq.s32.totalorder %s19, 1
    %p56 = por %p54, %p55
    %p58 = scmp.ne.s32.totalorder %s41, %s57
    %p59 = scmp.eq.s32.totalorder %s19, 0
    %p60 = por %p58, %p59
    %s61 = ssub.s32 %s20, %s32
    %s62 = ssub.s32 %s21, %s28
    %s63 = sor.u32 %s61, %s62
    %p64 = scmp.eq.s32.totalorder %s63, 0
    %s66 = sadd.s32 %s65, 1
    %s67 = scalar_select %p64, %s65, %s66
    %p70 = pneg %p64
    %p71 = scmp.eq.s32.totalorder %s13, 1
    %p72 = por %p70, %p71
    %p73 = scmp.ne.s32.totalorder %s65, %s68
    %p74 = scmp.eq.s32.totalorder %s13, 0
    %p75 = por %p73, %p74
    %p76 = scmp.ne.s32.totalorder %s65, %s68
    %p77 = scmp.eq.s32.totalorder %s18, 1
    %p78 = por %p76, %p77
    %p79 = scmp.ne.s32.totalorder %s68, %s69
    %p80 = scmp.eq.s32.totalorder %s18, 0
    %p81 = por %p79, %p80
    %p82 = scmp.ne.s32.totalorder %s68, %s69
    %p83 = scmp.eq.s32.totalorder %s19, 1
    %p84 = por %p82, %p83
    %p86 = scmp.ne.s32.totalorder %s69, %s85
    %p87 = scmp.eq.s32.totalorder %s19, 0
    %p88 = por %p86, %p87
    %s90 = sadd.s32 %s89, 1
    %p93 = scmp.eq.s32.totalorder %s13, 1
    %p94 = scmp.ne.s32.totalorder %s89, %s91
    %p95 = scmp.eq.s32.totalorder %s13, 0
    %p96 = por %p94, %p95
    %p97 = scmp.ne.s32.totalorder %s89, %s91
    %p98 = scmp.eq.s32.totalorder %s18, 1
    %p99 = por %p97, %p98
    %p100 = scmp.ne.s32.totalorder %s91, %s92
    %p101 = scmp.eq.s32.totalorder %s18, 0
    %p102 = por %p100, %p101
    %p103 = scmp.ne.s32.totalorder %s91, %s92
    %p104 = scmp.eq.s32.totalorder %s19, 1
    %p105 = por %p103, %p104
    %p107 = scmp.ne.s32.totalorder %s92, %s106
    %p108 = scmp.eq.s32.totalorder %s19, 0
    %p109 = por %p107, %p108
    %s111 = sadd.s32 %s110, 1
    %p114 = scmp.eq.s32.totalorder %s13, 1
    %p115 = scmp.ne.s32.totalorder %s110, %s112
    %p116 = scmp.eq.s32.totalorder %s13, 0
    %p117 = por %p115, %p116
    %p118 = scmp.ne.s32.totalorder %s110, %s112
    %p119 = scmp.eq.s32.totalorder %s18, 1
    %p120 = por %p118, %p119
    %p121 = scmp.ne.s32.totalorder %s112, %s113
    %p122 = scmp.eq.s32.totalorder %s18, 0
    %p123 = por %p121, %p122
    %p124 = scmp.ne.s32.totalorder %s112, %s113
    %p125 = scmp.eq.s32.totalorder %s19, 1
    %p126 = por %p124, %p125
    %p128 = scmp.ne.s32.totalorder %s113, %s127
    %p129 = scmp.eq.s32.totalorder %s19, 0
    %p130 = por %p128, %p129
    %s132 = sadd.s32 %s131, 1
    %p135 = scmp.eq.s32.totalorder %s13, 1
    %p136 = scmp.ne.s32.totalorder %s131, %s133
    %p137 = scmp.eq.s32.totalorder %s13, 0
    %p138 = por %p136, %p137
    %p139 = scmp.ne.s32.totalorder %s131, %s133
    %p140 = scmp.eq.s32.totalorder %s18, 1
    %p141 = por %p139, %p140
    %p142 = scmp.ne.s32.totalorder %s133, %s134
    %p143 = scmp.eq.s32.totalorder %s18, 0
    %p144 = por %p142, %p143
    %p145 = scmp.ne.s32.totalorder %s133, %s134
    %p146 = scmp.eq.s32.totalorder %s19, 1
    %p147 = por %p145, %p146
    %p149 = scmp.ne.s32.totalorder %s134, %s148
    %p150 = scmp.eq.s32.totalorder %s19, 0
    %p151 = por %p149, %p150
    %s152 = ssub.s32 %s20, %s32
    %p153 = scmp.eq.s32.totalorder %s152, 0
    %s155 = sadd.s32 %s154, 1
    %s156 = scalar_select %p153, %s154, %s155
    %p159 = pneg %p153
    %p160 = scmp.eq.s32.totalorder %s13, 1
    %p161 = por %p159, %p160
    %p162 = scmp.ne.s32.totalorder %s154, %s157
    %p163 = scmp.eq.s32.totalorder %s13, 0
    %p164 = por %p162, %p163
    %p165 = scmp.ne.s32.totalorder %s154, %s157
    %p166 = scmp.eq.s32.totalorder %s18, 1
    %p167 = por %p165, %p166
    %p168 = scmp.ne.s32.totalorder %s157, %s158
    %p169 = scmp.eq.s32.totalorder %s18, 0
    %p170 = por %p168, %p169
    %p171 = scmp.ne.s32.totalorder %s157, %s158
    %p172 = scmp.eq.s32.totalorder %s19, 1
    %p173 = por %p171, %p172
    %p175 = scmp.ne.s32.totalorder %s158, %s174
    %p176 = scmp.eq.s32.totalorder %s19, 0
    %p177 = por %p175, %p176
    %s178 = ssub.s32 %s20, %s32
    %p179 = scmp.eq.s32.totalorder %s178, 0
    %s181 = sadd.s32 %s180, 1
    %s182 = scalar_select %p179, %s180, %s181
    %p185 = pneg %p179
    %p186 = scmp.eq.s32.totalorder %s13, 1
    %p187 = por %p185, %p186
    %p188 = scmp.ne.s32.totalorder %s180, %s183
    %p189 = scmp.eq.s32.totalorder %s13, 0
    %p190 = por %p188, %p189
    %p191 = scmp.ne.s32.totalorder %s180, %s183
    %p192 = scmp.eq.s32.totalorder %s18, 1
    %p193 = por %p191, %p192
    %p194 = scmp.ne.s32.totalorder %s183, %s184
    %p195 = scmp.eq.s32.totalorder %s18, 0
    %p196 = por %p194, %p195
    %p197 = scmp.ne.s32.totalorder %s183, %s184
    %p198 = scmp.eq.s32.totalorder %s19, 1
    %p199 = por %p197, %p198
    %p201 = scmp.ne.s32.totalorder %s184, %s200
    %p202 = scmp.eq.s32.totalorder %s19, 0
    %p203 = por %p201, %p202
    %p204 = scmp.le.s32.totalorder 1, %s13
    %p205 = scmp.lt.s32.totalorder %s13, 3
    %p206 = pnand %p204, %p205
    %p207 = pneg %p206
    // Predicated region
    $region9: #{testm_forward.4} parent=5 // pred_check
      _
    $region10: #{testm_forward.4} parent=5 // pred_check_branch
      %209 = sbr.rel (%p206) target = $region12
    $region11: #{testm_forward.4} parent=5 // pred_region
      %s210 = ssub.s32 %s13, 1
      // Predicated region
      $region13: #{testm_forward.4} parent=11 // pred_check
        %p211 = pneg %p102
      $region14: #{testm_forward.4} parent=11 // pred_check_branch
        %213 = sbr.rel (%p211) target = $region16
      $region15: #{testm_forward.4} parent=11 // pred_region
        _
      $region16: #{testm_forward.4} parent=11 // pred_fallthru
        _
      // Predicated region
      $region17: #{testm_forward.4} parent=11 // pred_check
        %p214 = pneg %p123
      $region18: #{testm_forward.4} parent=11 // pred_check_branch
        %216 = sbr.rel (%p214) target = $region20
      $region19: #{testm_forward.4} parent=11 // pred_region
        _
      $region20: #{testm_forward.4} parent=11 // pred_fallthru
        _
      // Predicated region
      $region21: #{testm_forward.4} parent=11 // pred_check
        %p217 = pneg %p144
      $region22: #{testm_forward.4} parent=11 // pred_check_branch
        %219 = sbr.rel (%p217) target = $region24
      $region23: #{testm_forward.4} parent=11 // pred_region
        _
      $region24: #{testm_forward.4} parent=11 // pred_fallthru
        _
    $region12: #{testm_forward.4} parent=5 // pred_fallthru
      _
    %p220 = scmp.lt.s32.totalorder %s13, 2
    // Predicated region
    $region25: #{testm_forward.4} parent=5 // pred_check
      %p221 = pneg %p220
    $region26: #{testm_forward.4} parent=5 // pred_check_branch
      %223 = sbr.rel (%p221) target = $region28
    $region27: #{testm_forward.4} parent=5 // pred_region
      // Predicated region
      $region29: #{testm_forward.4} parent=27 // pred_check
        %p224 = pneg %p47
      $region30: #{testm_forward.4} parent=27 // pred_check_branch
        %226 = sbr.rel (%p224) target = $region32
      $region31: #{testm_forward.4} parent=27 // pred_region
        %s227 = smul.u32 2, %s21
        %p228 = scmp.lt.s32.totalorder %s20, 1
        %s229 = scalar_select %p228, %s20, 1
        %p230 = scmp.lt.s32.totalorder %s227, 1
        %s231 = scalar_select %p230, %s227, 1
        %s232 = smul.addr %s229, 2
        %s233 = sadd.s32 %s231, %s232
        %s234 = smul.addr %s233, 4
        %s235 = scalar_lea.vmem %s0, %s234
        %s236 = smul.u32 2, %s21
      $region32: #{testm_forward.4} parent=27 // pred_fallthru
        _
      // Predicated region
      $region33: #{testm_forward.4} parent=27 // pred_check
        %p237 = pneg %p75
      $region34: #{testm_forward.4} parent=27 // pred_check_branch
        %239 = sbr.rel (%p237) target = $region36
      $region35: #{testm_forward.4} parent=27 // pred_region
        %s240 = smul.u32 2, %s21
        %p241 = scmp.lt.s32.totalorder %s20, 1
        %s242 = scalar_select %p241, %s20, 1
        %p243 = scmp.lt.s32.totalorder %s240, 1
        %s244 = scalar_select %p243, %s240, 1
        %s245 = smul.addr %s242, 2
        %s246 = sadd.s32 %s244, %s245
        %s247 = scalar_lea.vmem %s1, %s246
        %s248 = smul.u32 2, %s21
      $region36: #{testm_forward.4} parent=27 // pred_fallthru
        _
    $region28: #{testm_forward.4} parent=5 // pred_fallthru
      _
    %p249 = scmp.le.s32.totalorder 1, %s13
    %p250 = scmp.lt.s32.totalorder %s13, 3
    %p251 = pnand %p249, %p250
    %p252 = pneg %p251
    // Predicated region
    $region37: #{testm_forward.4} parent=5 // pred_check
      _
    $region38: #{testm_forward.4} parent=5 // pred_check_branch
      %254 = sbr.rel (%p251) target = $region40
    $region39: #{testm_forward.4} parent=5 // pred_region
      %s255 = ssub.s32 %s13, 1
      %s256 = smul.u32 2, %s23
      %p257 = scmp.lt.s32.totalorder %s22, 1
      %s258 = scalar_select %p257, %s22, 1
      %p259 = scmp.lt.s32.totalorder %s256, 1
      %s260 = scalar_select %p259, %s256, 1
      %s261 = smul.addr %s258, 2
      %s262 = sadd.s32 %s260, %s261
      %s263 = smul.addr %s262, 4
      %s264 = scalar_lea.vmem %s0, %s263
      %p265 = pneg %p53
      %p266 = pneg %p50
      %s267 = smul.u32 2, %s23
      %p268 = scmp.lt.s32.totalorder %s22, 1
      %s269 = scalar_select %p268, %s22, 1
      %p270 = scmp.lt.s32.totalorder %s267, 1
      %s271 = scalar_select %p270, %s267, 1
      %s272 = smul.addr %s269, 2
      %s273 = sadd.s32 %s271, %s272
      %s274 = scalar_lea.vmem %s1, %s273
      %p275 = pneg %p81
      %p276 = pneg %p78
      %p277 = pneg %p102
      %p278 = pneg %p99
      %p279 = pneg %p123
      %p280 = pneg %p120
      %p281 = pneg %p144
      %p282 = pneg %p141
      %p283 = pneg %p170
      %p284 = pneg %p167
      %p285 = scmp.lt.s32.totalorder %s22, 1
      %s286 = scalar_select %p285, %s22, 1
      %s287 = smul.addr %s286, 8
      %s288 = smul.addr %s287, 8
      %s289 = scalar_lea.vmem %s5, %s288
      %p290 = pneg %p196
      %p291 = pneg %p193
      %p292 = scmp.lt.s32.totalorder %s22, 1
      %s293 = scalar_select %p292, %s22, 1
      %s294 = smul.addr %s293, 8
      %s295 = smul.addr %s294, 8
      %s296 = scalar_lea.vmem %s6, %s295
      %s297 = smul.u32 2, %s23
      %p298 = scmp.lt.s32.totalorder %s22, 1
      %s299 = scalar_select %p298, %s22, 1
      %p300 = scmp.lt.s32.totalorder %s297, 1
      %s301 = scalar_select %p300, %s297, 1
      %s302 = smul.addr %s299, 2
      %s303 = sadd.s32 %s301, %s302
      %s304 = smul.addr %s303, 4
      %s305 = scalar_lea.vmem %s0, %s304
      %s306 = smul.u32 2, %s23
      %s307 = smul.u32 2, %s23
      %p308 = scmp.lt.s32.totalorder %s22, 1
      %s309 = scalar_select %p308, %s22, 1
      %p310 = scmp.lt.s32.totalorder %s307, 1
      %s311 = scalar_select %p310, %s307, 1
      %s312 = smul.addr %s309, 2
      %s313 = sadd.s32 %s311, %s312
      %s314 = scalar_lea.vmem %s1, %s313
      %s315 = smul.u32 2, %s23
      %p316 = scmp.lt.s32.totalorder %s22, 1
      %s317 = scalar_select %p316, %s22, 1
      %s318 = smul.addr %s317, 8
      %s319 = smul.addr %s318, 8
      %s320 = scalar_lea.vmem %s5, %s319
      %p321 = scmp.lt.s32.totalorder %s22, 1
      %s322 = scalar_select %p321, %s22, 1
      %s323 = smul.addr %s322, 8
      %s324 = smul.addr %s323, 8
      %s325 = scalar_lea.vmem %s6, %s324
      %p326 = scmp.eq.s32.totalorder %s23, 0
      // Predicated region
      $region41: #{testm_forward.4} parent=39 // pred_check
        %p327 = pneg %p326
      $region42: #{testm_forward.4} parent=39 // pred_check_branch
        %329 = sbr.rel (%p327) target = $region44
      $region43: #{testm_forward.4} parent=39 // pred_region
        %vm330 = vcmask 7168
        %331 = vst.msk [vmem:[%s320] sm:$0xff] %vm330, 0.0
        %332 = vst.msk [vmem:[%s320 + $0x8] sm:$0xff] %vm330, 0.0
        %333 = vst.msk [vmem:[%s320 + $0x10] sm:$0xff] %vm330, 0.0
        %334 = vst.msk [vmem:[%s320 + $0x18] sm:$0xff] %vm330, 0.0
        %335 = vst.msk [vmem:[%s320 + $0x20] sm:$0xff] %vm330, 0.0
        %336 = vst.msk [vmem:[%s320 + $0x28] sm:$0xff] %vm330, 0.0
        %337 = vst.msk [vmem:[%s320 + $0x30] sm:$0xff] %vm330, 0.0
        %338 = vst.msk [vmem:[%s320 + $0x38] sm:$0xff] %vm330, 0.0
        %339 = vst.msk [vmem:[%s325] sm:$0xff] %vm330, 0.0
        %340 = vst.msk [vmem:[%s325 + $0x8] sm:$0xff] %vm330, 0.0
        %341 = vst.msk [vmem:[%s325 + $0x10] sm:$0xff] %vm330, 0.0
        %342 = vst.msk [vmem:[%s325 + $0x18] sm:$0xff] %vm330, 0.0
        %343 = vst.msk [vmem:[%s325 + $0x20] sm:$0xff] %vm330, 0.0
        %344 = vst.msk [vmem:[%s325 + $0x28] sm:$0xff] %vm330, 0.0
        %345 = vst.msk [vmem:[%s325 + $0x30] sm:$0xff] %vm330, 0.0
        %346 = vst.msk [vmem:[%s325 + $0x38] sm:$0xff] %vm330, 0.0
      $region44: #{testm_forward.4} parent=39 // pred_fallthru
        _
      %v347 = vld [vmem:[%s305] sm:$0x77]
      %v348 = vld [vmem:[%s314] sm:$0x3]
      %v350 = vperm.slane %v348, 0
      %v351 = vperm.slane %v348, 1
      %v352 = vrot.slane %v351, 4
      %vm353 = vcmask 1043456
      %v354 = vsel %vm353, %v350, %v352
      %v356 = vadd.f32 %v347, %v354
      %v357 = vld [vmem:[%s2] sm:$0xff]
      %v358 = vld [vmem:[%s2 + $0x8] sm:$0xff]
      %v359 = vld [vmem:[%s2 + $0x10] sm:$0xff]
      %v360 = vld [vmem:[%s2 + $0x18] sm:$0xff]
      %v361 = vld [vmem:[%s2 + $0x20] sm:$0xff]
      %v362 = vld [vmem:[%s2 + $0x28] sm:$0xff]
      %v363 = vld [vmem:[%s2 + $0x30] sm:$0xff]
      %v364 = vld [vmem:[%s2 + $0x38] sm:$0xff]
      %v365 = vld [vmem:[%s3] sm:$0xff]
      %v366 = vld [vmem:[%s3 + $0x8] sm:$0xff]
      %v367 = vld [vmem:[%s3 + $0x10] sm:$0xff]
      %v368 = vld [vmem:[%s3 + $0x18] sm:$0xff]
      %v369 = vld [vmem:[%s3 + $0x20] sm:$0xff]
      %v370 = vld [vmem:[%s3 + $0x28] sm:$0xff]
      %v371 = vld [vmem:[%s3 + $0x30] sm:$0xff]
      %v372 = vld [vmem:[%s3 + $0x38] sm:$0xff]
      %374 = vset.pattern.permute.xlu0 0
      %375 = vperm.xlu0 %374, %v365
      %v376 = vpop.permute.xlu0 %375
      %379 = vset.pattern.permute.xlu0 0
      %380 = vperm.xlu0 %379, %v366
      %v381 = vpop.permute.xlu0 %380
      %384 = vset.pattern.permute.xlu0 0
      %385 = vperm.xlu0 %384, %v367
      %v386 = vpop.permute.xlu0 %385
      %389 = vset.pattern.permute.xlu0 0
      %390 = vperm.xlu0 %389, %v368
      %v391 = vpop.permute.xlu0 %390
      %394 = vset.pattern.permute.xlu0 0
      %395 = vperm.xlu0 %394, %v369
      %v396 = vpop.permute.xlu0 %395
      %399 = vset.pattern.permute.xlu0 0
      %400 = vperm.xlu0 %399, %v370
      %v401 = vpop.permute.xlu0 %400
      %404 = vset.pattern.permute.xlu0 0
      %405 = vperm.xlu0 %404, %v371
      %v406 = vpop.permute.xlu0 %405
      %409 = vset.pattern.permute.xlu0 0
      %410 = vperm.xlu0 %409, %v372
      %v411 = vpop.permute.xlu0 %410
      %414 = vst [vmem:[#allocation1] ss:$2 sm:$0xff] %v356
      %v415 = vld.sshfl [vmem:[#allocation1] sm:$0xff pattern:$0x75316420]
      %v416 = vld.sshfl [vmem:[#allocation1 + $0x8] sm:$0xff pattern:$0x75316420]
      %vm417 = vcmask 23552
      %v419 = vsel %vm417, %v357, 0
      %v422 = vsel %vm417, %v358, 0
      %v425 = vsel %vm417, %v359, 0
      %v428 = vsel %vm417, %v360, 0
      %v431 = vsel %vm417, %v361, 0
      %v434 = vsel %vm417, %v362, 0
      %v437 = vsel %vm417, %v363, 0
      %v440 = vsel %vm417, %v364, 0
      %vm442 = vcmask 1042432
      %v443 = vsel %vm442, %v415, 0
      %v445 = vsel %vm442, %v416, 0
      %447 = vmatpush.msra.mxu0 0.0
      %448 = vmatpush.msra.mxu0 0.0
      %449 = vmatpush.msra.mxu0 0.0
      %450 = vmatpush.msra.mxu0 0.0
      %451 = vmatpush.msra.mxu0 0.0
      %452 = vmatpush.msra.mxu0 0.0
      %453 = vmatpush.msra.mxu0 0.0
      %454 = vmatpush.msra.mxu0 0.0
      %455 = vmatpush.msra.mxu0 0.0
      %456 = vmatpush.msra.mxu0 0.0
      %457 = vmatpush.msra.mxu0 0.0
      %458 = vmatpush.msra.mxu0 0.0
      %459 = vmatpush.msra.mxu0 0.0
      %460 = vmatpush.msra.mxu0 0.0
      %461 = vmatpush.msra.mxu0 0.0
      %462 = vmatpush.msra.mxu0 %v443
      %463 = vmatmul.f32.gmra.mxu0 %v419
      %v464 = vpop.f32.mrf.mxu0
      %v465 = vadd.f32 %v376, %v464
      %466 = vmatmul.f32.gmra.mxu0 %v422
      %v467 = vpop.f32.mrf.mxu0
      %v468 = vadd.f32 %v381, %v467
      %469 = vmatmul.f32.gmra.mxu0 %v425
      %v470 = vpop.f32.mrf.mxu0
      %v471 = vadd.f32 %v386, %v470
      %472 = vmatmul.f32.gmra.mxu0 %v428
      %v473 = vpop.f32.mrf.mxu0
      %v474 = vadd.f32 %v391, %v473
      %475 = vmatmul.f32.gmra.mxu0 %v431
      %v476 = vpop.f32.mrf.mxu0
      %v477 = vadd.f32 %v396, %v476
      %478 = vmatmul.f32.gmra.mxu0 %v434
      %v479 = vpop.f32.mrf.mxu0
      %v480 = vadd.f32 %v401, %v479
      %481 = vmatmul.f32.gmra.mxu0 %v437
      %v482 = vpop.f32.mrf.mxu0
      %v483 = vadd.f32 %v406, %v482
      %484 = vmatmul.f32.gmra.mxu0 %v440
      %v485 = vpop.f32.mrf.mxu0
      %v486 = vadd.f32 %v411, %v485
      %487 = vdwg.mxu0
      %488 = vmatpush.msra.mxu0 0.0
      %489 = vmatpush.msra.mxu0 0.0
      %490 = vmatpush.msra.mxu0 0.0
      %491 = vmatpush.msra.mxu0 0.0
      %492 = vmatpush.msra.mxu0 0.0
      %493 = vmatpush.msra.mxu0 0.0
      %494 = vmatpush.msra.mxu0 0.0
      %495 = vmatpush.msra.mxu0 0.0
      %496 = vmatpush.msra.mxu0 0.0
      %497 = vmatpush.msra.mxu0 0.0
      %498 = vmatpush.msra.mxu0 0.0
      %499 = vmatpush.msra.mxu0 0.0
      %500 = vmatpush.msra.mxu0 0.0
      %501 = vmatpush.msra.mxu0 0.0
      %502 = vmatpush.msra.mxu0 0.0
      %503 = vmatpush.msra.mxu0 %v445
      %504 = vmatmul.f32.gmra.mxu0 %v419
      %v505 = vpop.f32.mrf.mxu0
      %v506 = vadd.f32 %v376, %v505
      %507 = vmatmul.f32.gmra.mxu0 %v422
      %v508 = vpop.f32.mrf.mxu0
      %v509 = vadd.f32 %v381, %v508
      %510 = vmatmul.f32.gmra.mxu0 %v425
      %v511 = vpop.f32.mrf.mxu0
      %v512 = vadd.f32 %v386, %v511
      %513 = vmatmul.f32.gmra.mxu0 %v428
      %v514 = vpop.f32.mrf.mxu0
      %v515 = vadd.f32 %v391, %v514
      %516 = vmatmul.f32.gmra.mxu0 %v431
      %v517 = vpop.f32.mrf.mxu0
      %v518 = vadd.f32 %v396, %v517
      %519 = vmatmul.f32.gmra.mxu0 %v434
      %v520 = vpop.f32.mrf.mxu0
      %v521 = vadd.f32 %v401, %v520
      %522 = vmatmul.f32.gmra.mxu0 %v437
      %v523 = vpop.f32.mrf.mxu0
      %v524 = vadd.f32 %v406, %v523
      %525 = vmatmul.f32.gmra.mxu0 %v440
      %v526 = vpop.f32.mrf.mxu0
      %v527 = vadd.f32 %v411, %v526
      %528 = vdwg.mxu0
      %v529 = vmax.f32 %v465, 0.0
      %v530 = vmax.f32 %v506, 0.0
      %v531 = vmax.f32 %v468, 0.0
      %v532 = vmax.f32 %v509, 0.0
      %v533 = vmax.f32 %v471, 0.0
      %v534 = vmax.f32 %v512, 0.0
      %v535 = vmax.f32 %v474, 0.0
      %v536 = vmax.f32 %v515, 0.0
      %v537 = vmax.f32 %v477, 0.0
      %v538 = vmax.f32 %v518, 0.0
      %v539 = vmax.f32 %v480, 0.0
      %v540 = vmax.f32 %v521, 0.0
      %v541 = vmax.f32 %v483, 0.0
      %v542 = vmax.f32 %v524, 0.0
      %v543 = vmax.f32 %v486, 0.0
      %v544 = vmax.f32 %v527, 0.0
      %v545 = vld [vmem:[%s4] sm:$0xff]
      %v546 = vld [vmem:[%s4 + $0x8] sm:$0xff]
      %v547 = vld [vmem:[%s4 + $0x10] sm:$0xff]
      %v548 = vld [vmem:[%s4 + $0x18] sm:$0xff]
      %v549 = vld [vmem:[%s4 + $0x20] sm:$0xff]
      %v550 = vld [vmem:[%s4 + $0x28] sm:$0xff]
      %v551 = vld [vmem:[%s4 + $0x30] sm:$0xff]
      %v552 = vld [vmem:[%s4 + $0x38] sm:$0xff]
      %vm553 = vcmask 523264
      %v555 = vsel %vm553, %v545, 0
      %v558 = vsel %vm553, %v546, 0
      %v561 = vsel %vm553, %v547, 0
      %v564 = vsel %vm553, %v548, 0
      %v567 = vsel %vm553, %v549, 0
      %v570 = vsel %vm553, %v550, 0
      %v573 = vsel %vm553, %v551, 0
      %v576 = vsel %vm553, %v552, 0
      %578 = vmatpush.msra.mxu0 0.0
      %579 = vmatpush.msra.mxu0 0.0
      %580 = vmatpush.msra.mxu0 0.0
      %581 = vmatpush.msra.mxu0 0.0
      %582 = vmatpush.msra.mxu0 0.0
      %583 = vmatpush.msra.mxu0 0.0
      %584 = vmatpush.msra.mxu0 0.0
      %585 = vmatpush.msra.mxu0 0.0
      %586 = vmatpush.msra.mxu0 %v543
      %587 = vmatpush.msra.mxu0 %v541
      %588 = vmatpush.msra.mxu0 %v539
      %589 = vmatpush.msra.mxu0 %v537
      %590 = vmatpush.msra.mxu0 %v535
      %591 = vmatpush.msra.mxu0 %v533
      %592 = vmatpush.msra.mxu0 %v531
      %593 = vmatpush.msra.mxu0 %v529
      %594 = vmatmul.f32.gmra.mxu0 %v555
      %v595 = vpop.f32.mrf.mxu0
      %v596 = vadd.f32 0.0, %v595
      %597 = vmatmul.f32.gmra.mxu0 %v558
      %v598 = vpop.f32.mrf.mxu0
      %v599 = vadd.f32 0.0, %v598
      %600 = vmatmul.f32.gmra.mxu0 %v561
      %v601 = vpop.f32.mrf.mxu0
      %v602 = vadd.f32 0.0, %v601
      %603 = vmatmul.f32.gmra.mxu0 %v564
      %v604 = vpop.f32.mrf.mxu0
      %v605 = vadd.f32 0.0, %v604
      %606 = vmatmul.f32.gmra.mxu0 %v567
      %v607 = vpop.f32.mrf.mxu0
      %v608 = vadd.f32 0.0, %v607
      %609 = vmatmul.f32.gmra.mxu0 %v570
      %v610 = vpop.f32.mrf.mxu0
      %v611 = vadd.f32 0.0, %v610
      %612 = vmatmul.f32.gmra.mxu0 %v573
      %v613 = vpop.f32.mrf.mxu0
      %v614 = vadd.f32 0.0, %v613
      %615 = vmatmul.f32.gmra.mxu0 %v576
      %v616 = vpop.f32.mrf.mxu0
      %v617 = vadd.f32 0.0, %v616
      %618 = vdwg.mxu0
      %619 = vmatpush.msra.mxu0 0.0
      %620 = vmatpush.msra.mxu0 0.0
      %621 = vmatpush.msra.mxu0 0.0
      %622 = vmatpush.msra.mxu0 0.0
      %623 = vmatpush.msra.mxu0 0.0
      %624 = vmatpush.msra.mxu0 0.0
      %625 = vmatpush.msra.mxu0 0.0
      %626 = vmatpush.msra.mxu0 0.0
      %627 = vmatpush.msra.mxu0 %v544
      %628 = vmatpush.msra.mxu0 %v542
      %629 = vmatpush.msra.mxu0 %v540
      %630 = vmatpush.msra.mxu0 %v538
      %631 = vmatpush.msra.mxu0 %v536
      %632 = vmatpush.msra.mxu0 %v534
      %633 = vmatpush.msra.mxu0 %v532
      %634 = vmatpush.msra.mxu0 %v530
      %635 = vmatmul.f32.gmra.mxu0 %v555
      %v636 = vpop.f32.mrf.mxu0
      %v637 = vadd.f32 0.0, %v636
      %638 = vmatmul.f32.gmra.mxu0 %v558
      %v639 = vpop.f32.mrf.mxu0
      %v640 = vadd.f32 0.0, %v639
      %641 = vmatmul.f32.gmra.mxu0 %v561
      %v642 = vpop.f32.mrf.mxu0
      %v643 = vadd.f32 0.0, %v642
      %644 = vmatmul.f32.gmra.mxu0 %v564
      %v645 = vpop.f32.mrf.mxu0
      %v646 = vadd.f32 0.0, %v645
      %647 = vmatmul.f32.gmra.mxu0 %v567
      %v648 = vpop.f32.mrf.mxu0
      %v649 = vadd.f32 0.0, %v648
      %650 = vmatmul.f32.gmra.mxu0 %v570
      %v651 = vpop.f32.mrf.mxu0
      %v652 = vadd.f32 0.0, %v651
      %653 = vmatmul.f32.gmra.mxu0 %v573
      %v654 = vpop.f32.mrf.mxu0
      %v655 = vadd.f32 0.0, %v654
      %656 = vmatmul.f32.gmra.mxu0 %v576
      %v657 = vpop.f32.mrf.mxu0
      %v658 = vadd.f32 0.0, %v657
      %659 = vdwg.mxu0
      %v660 = vld [vmem:[%s320] sm:$0xff]
      %v661 = vld [vmem:[%s320 + $0x8] sm:$0xff]
      %v662 = vld [vmem:[%s320 + $0x10] sm:$0xff]
      %v663 = vld [vmem:[%s320 + $0x18] sm:$0xff]
      %v664 = vld [vmem:[%s320 + $0x20] sm:$0xff]
      %v665 = vld [vmem:[%s320 + $0x28] sm:$0xff]
      %v666 = vld [vmem:[%s320 + $0x30] sm:$0xff]
      %v667 = vld [vmem:[%s320 + $0x38] sm:$0xff]
      %v668 = vadd.f32 %v596, %v637
      %669 = vadd.xlane.f32.xlu0 %v668
      %v670 = vpop.xlane.xlu0 %669
      %v671 = vadd.f32 %v599, %v640
      %672 = vadd.xlane.f32.xlu0 %v671
      %v673 = vpop.xlane.xlu0 %672
      %v674 = vadd.f32 %v602, %v643
      %675 = vadd.xlane.f32.xlu0 %v674
      %v676 = vpop.xlane.xlu0 %675
      %v677 = vadd.f32 %v605, %v646
      %678 = vadd.xlane.f32.xlu0 %v677
      %v679 = vpop.xlane.xlu0 %678
      %v680 = vadd.f32 %v608, %v649
      %681 = vadd.xlane.f32.xlu0 %v680
      %v682 = vpop.xlane.xlu0 %681
      %v683 = vadd.f32 %v611, %v652
      %684 = vadd.xlane.f32.xlu0 %v683
      %v685 = vpop.xlane.xlu0 %684
      %v686 = vadd.f32 %v614, %v655
      %687 = vadd.xlane.f32.xlu0 %v686
      %v688 = vpop.xlane.xlu0 %687
      %v689 = vadd.f32 %v617, %v658
      %690 = vadd.xlane.f32.xlu0 %v689
      %v691 = vpop.xlane.xlu0 %690
      %v692 = vadd.f32 %v660, %v670
      %v693 = vadd.f32 %v661, %v673
      %v694 = vadd.f32 %v662, %v676
      %v695 = vadd.f32 %v663, %v679
      %v696 = vadd.f32 %v664, %v682
      %v697 = vadd.f32 %v665, %v685
      %v698 = vadd.f32 %v666, %v688
      %v699 = vadd.f32 %v667, %v691
      %vm700 = vcmask 7168
      %701 = vst.msk [vmem:[%s320] sm:$0xff] %vm700, %v692
      %702 = vst.msk [vmem:[%s320 + $0x8] sm:$0xff] %vm700, %v693
      %703 = vst.msk [vmem:[%s320 + $0x10] sm:$0xff] %vm700, %v694
      %704 = vst.msk [vmem:[%s320 + $0x18] sm:$0xff] %vm700, %v695
      %705 = vst.msk [vmem:[%s320 + $0x20] sm:$0xff] %vm700, %v696
      %706 = vst.msk [vmem:[%s320 + $0x28] sm:$0xff] %vm700, %v697
      %707 = vst.msk [vmem:[%s320 + $0x30] sm:$0xff] %vm700, %v698
      %708 = vst.msk [vmem:[%s320 + $0x38] sm:$0xff] %vm700, %v699
      %v709 = vld [vmem:[%s325] sm:$0xff]
      %v710 = vld [vmem:[%s325 + $0x8] sm:$0xff]
      %v711 = vld [vmem:[%s325 + $0x10] sm:$0xff]
      %v712 = vld [vmem:[%s325 + $0x18] sm:$0xff]
      %v713 = vld [vmem:[%s325 + $0x20] sm:$0xff]
      %v714 = vld [vmem:[%s325 + $0x28] sm:$0xff]
      %v715 = vld [vmem:[%s325 + $0x30] sm:$0xff]
      %v716 = vld [vmem:[%s325 + $0x38] sm:$0xff]
      %v717 = vmul.f32 %v596, %v596
      %v718 = vmul.f32 %v637, %v637
      %v719 = vmul.f32 %v599, %v599
      %v720 = vmul.f32 %v640, %v640
      %v721 = vmul.f32 %v602, %v602
      %v722 = vmul.f32 %v643, %v643
      %v723 = vmul.f32 %v605, %v605
      %v724 = vmul.f32 %v646, %v646
      %v725 = vmul.f32 %v608, %v608
      %v726 = vmul.f32 %v649, %v649
      %v727 = vmul.f32 %v611, %v611
      %v728 = vmul.f32 %v652, %v652
      %v729 = vmul.f32 %v614, %v614
      %v730 = vmul.f32 %v655, %v655
      %v731 = vmul.f32 %v617, %v617
      %v732 = vmul.f32 %v658, %v658
      %v733 = vadd.f32 %v717, %v718
      %734 = vadd.xlane.f32.xlu0 %v733
      %v735 = vpop.xlane.xlu0 %734
      %v736 = vadd.f32 %v719, %v720
      %737 = vadd.xlane.f32.xlu0 %v736
      %v738 = vpop.xlane.xlu0 %737
      %v739 = vadd.f32 %v721, %v722
      %740 = vadd.xlane.f32.xlu0 %v739
      %v741 = vpop.xlane.xlu0 %740
      %v742 = vadd.f32 %v723, %v724
      %743 = vadd.xlane.f32.xlu0 %v742
      %v744 = vpop.xlane.xlu0 %743
      %v745 = vadd.f32 %v725, %v726
      %746 = vadd.xlane.f32.xlu0 %v745
      %v747 = vpop.xlane.xlu0 %746
      %v748 = vadd.f32 %v727, %v728
      %749 = vadd.xlane.f32.xlu0 %v748
      %v750 = vpop.xlane.xlu0 %749
      %v751 = vadd.f32 %v729, %v730
      %752 = vadd.xlane.f32.xlu0 %v751
      %v753 = vpop.xlane.xlu0 %752
      %v754 = vadd.f32 %v731, %v732
      %755 = vadd.xlane.f32.xlu0 %v754
      %v756 = vpop.xlane.xlu0 %755
      %v757 = vadd.f32 %v709, %v735
      %v758 = vadd.f32 %v710, %v738
      %v759 = vadd.f32 %v711, %v741
      %v760 = vadd.f32 %v712, %v744
      %v761 = vadd.f32 %v713, %v747
      %v762 = vadd.f32 %v714, %v750
      %v763 = vadd.f32 %v715, %v753
      %v764 = vadd.f32 %v716, %v756
      %765 = vst.msk [vmem:[%s325] sm:$0xff] %vm700, %v757
      %766 = vst.msk [vmem:[%s325 + $0x8] sm:$0xff] %vm700, %v758
      %767 = vst.msk [vmem:[%s325 + $0x10] sm:$0xff] %vm700, %v759
      %768 = vst.msk [vmem:[%s325 + $0x18] sm:$0xff] %vm700, %v760
      %769 = vst.msk [vmem:[%s325 + $0x20] sm:$0xff] %vm700, %v761
      %770 = vst.msk [vmem:[%s325 + $0x28] sm:$0xff] %vm700, %v762
      %771 = vst.msk [vmem:[%s325 + $0x30] sm:$0xff] %vm700, %v763
      %772 = vst.msk [vmem:[%s325 + $0x38] sm:$0xff] %vm700, %v764
      %p773 = scmp.lt.s32.totalorder %s22, 1
      %s774 = scalar_select %p773, %s22, 1
      %s775 = smul.addr %s774, 8
      %s776 = smul.addr %s775, 8
      %s777 = scalar_lea.vmem %s5, %s776
      %p778 = scmp.lt.s32.totalorder %s22, 1
      %s779 = scalar_select %p778, %s22, 1
      %s780 = smul.addr %s779, 8
      %s781 = smul.addr %s780, 8
      %s782 = scalar_lea.vmem %s6, %s781
      // Predicated region
      $region45: #{testm_forward.4} parent=39 // pred_check
        %p783 = pneg %p167
      $region46: #{testm_forward.4} parent=39 // pred_check_branch
        %785 = sbr.rel (%p783) target = $region48
      $region47: #{testm_forward.4} parent=39 // pred_region
        _
      $region48: #{testm_forward.4} parent=39 // pred_fallthru
        _
      // Predicated region
      $region49: #{testm_forward.4} parent=39 // pred_check
        %p786 = pneg %p193
      $region50: #{testm_forward.4} parent=39 // pred_check_branch
        %788 = sbr.rel (%p786) target = $region52
      $region51: #{testm_forward.4} parent=39 // pred_region
        _
      $region52: #{testm_forward.4} parent=39 // pred_fallthru
        _
    $region40: #{testm_forward.4} parent=5 // pred_fallthru
      _
    %p789 = scmp.le.s32.totalorder 2, %s13
    // Predicated region
    $region53: #{testm_forward.4} parent=5 // pred_check
      %p790 = pneg %p789
    $region54: #{testm_forward.4} parent=5 // pred_check_branch
      %792 = sbr.rel (%p790) target = $region56
    $region55: #{testm_forward.4} parent=5 // pred_region
      %s793 = ssub.s32 %s13, 2
      // Predicated region
      $region57: #{testm_forward.4} parent=55 // pred_check
        %p794 = pneg %p173
      $region58: #{testm_forward.4} parent=55 // pred_check_branch
        %796 = sbr.rel (%p794) target = $region60
      $region59: #{testm_forward.4} parent=55 // pred_region
        %p797 = scmp.lt.s32.totalorder %s24, 1
        %s798 = scalar_select %p797, %s24, 1
        %s799 = smul.addr %s798, 8
        %s800 = smul.addr %s799, 8
        %s801 = scalar_lea.vmem %s5, %s800
      $region60: #{testm_forward.4} parent=55 // pred_fallthru
        _
      // Predicated region
      $region61: #{testm_forward.4} parent=55 // pred_check
        %p802 = pneg %p199
      $region62: #{testm_forward.4} parent=55 // pred_check_branch
        %804 = sbr.rel (%p802) target = $region64
      $region63: #{testm_forward.4} parent=55 // pred_region
        %p805 = scmp.lt.s32.totalorder %s24, 1
        %s806 = scalar_select %p805, %s24, 1
        %s807 = smul.addr %s806, 8
        %s808 = smul.addr %s807, 8
        %s809 = scalar_lea.vmem %s6, %s808
      $region64: #{testm_forward.4} parent=55 // pred_fallthru
        _
    $region56: #{testm_forward.4} parent=5 // pred_fallthru
      _
  $region6: #{testm_forward.4} parent=0 // loop_footer
    %s17 = sadd.s32 1, %s13
  $region7: #{testm_forward.4} parent=0 // loop_footer_branch
    %12 = sbr.rel target = $region3
  $region8: #{testm_forward.4} parent=0 // loop_exit
    _

</llo_original>
